<compile_context>
chip_gen: v5e
topology: v5e:2x2
jax: 0.10.0
libtpu: 0.0.40
codegen_flags: <defaults>
</compile_context>

<pallas_src>
import jax
import jax.numpy as jnp
from jax import lax
from jax.experimental import pallas as pl
from jax.experimental.pallas import tpu as pltpu

# ----------------------------- configuration -------------------------------
B = 2            # batch
CIN = 3          # image channels
IMG = 16         # image H = W
K = 3            # backbone conv kernel
STRIDE = 2       # backbone conv stride
PAD = 1
HF = IMG // STRIDE
WF = IMG // STRIDE
A = HF * WF              # anchors per image
BA = B * A               # total anchors (= 128)
C1 = 32                  # backbone channels
NC = 8                   # num classes
REG_MAX = 16             # DFL bins
DW = 4 * REG_MAX         # DFL block width (64)
NO = DW + NC             # real per-anchor prediction width (72)
NOP = 128                # padded head width (lane-dense)
NCT = 16                 # class-target width (NC real + pad)
CK = CIN * K * K         # im2col patch width (27)
CKP = 32                 # padded contraction dim
TM = 128                 # anchor-row tile -> grid=(1,) at this size

BOX_GAIN, CLS_GAIN, DFL_GAIN = 7.5, 0.5, 1.5   # v8DetectionLoss default hyp

# accumulator lane layout of the single (1, NOP) scratch
ACC_DFL0 = 0                   # lanes [0, 64)   per-bin DFL partials
ACC_CLS0 = DW                  # lanes [64, 80)  per-class BCE partials
ACC_BOX = DW + NCT             # lane 80         box partial
ACC_W = DW + NCT + 1           # lane 81         target-score-sum partial
ACC_PAD = NOP - (DW + NCT + 2)


# ----------------------------- fused Pallas kernel ---------------------------
def fused_yolo_loss_kernel(patch_ref, w1_ref, b1_ref, w2_ref, b2_ref,
                           tsc_ref, dflw_ref, meta_ref, segmat_ref, cvec_ref,
                           out_ref, acc_ref):
    """Backbone conv-as-matmul (bf16) + SiLU + 1x1 head, with the v8-style loss
    computed as an epilogue on the resident preds tile (P3 accumulator)."""
    step = pl.program_id(0)

    @pl.when(step == 0)
    def _():
        acc_ref[...] = jnp.zeros_like(acc_ref)

    # ---------------- model (bf16 MXU matmuls + SiLU) ----------------
    feat = jnp.dot(patch_ref[...], w1_ref[...],
                   preferred_element_type=jnp.float32) + b1_ref[...]
    feat = feat * (0.5 * jnp.tanh(0.5 * feat) + 0.5)                 # SiLU, 1 EUP op
    preds = jnp.dot(feat.astype(jnp.bfloat16), w2_ref[...],
                    preferred_element_type=jnp.float32) + b2_ref[...]  # (TM, NOP) f32

    # ---------------- loss epilogue (preds stay in VMEM) ----------------
    pd = preds[:, 0:DW]                     # (TM, 64) DFL logits, side-major/bin-minor
    pc = preds[:, DW:DW + NCT]              # (TM, 16) class logits (8 real + 8 pad)
    tsc = tsc_ref[...]                      # (TM, 16) target scores
    dflw = dflw_ref[...]                    # (TM, 64) soft DFL bin targets
    meta = meta_ref[...]                    # (TM, 8)  [ax, ay, x1, y1, x2, y2, fg, w]
    binv = cvec_ref[:, 0:DW]                # (1, 64)  bin index within side (0..15)
    clsmask = cvec_ref[:, DW:DW + NCT]      # (1, 16)  1 for real classes, 0 for pad

    ax, ay = meta[:, 0:1], meta[:, 1:2]
    tx1, ty1 = meta[:, 2:3], meta[:, 3:4]
    tx2, ty2 = meta[:, 4:5], meta[:, 5:6]
    fg, wgt = meta[:, 6:7], meta[:, 7:8]
    wfg = wgt * fg

    # Per-SIDE max shift (keeps every per-side softmax sum >= 1: log/divide safe).
    ones16 = jnp.ones((1, REG_MAX), jnp.float32)
    maxs = [jnp.max(pd[:, s * REG_MAX:(s + 1) * REG_MAX], axis=-1, keepdims=True)
            for s in range(4)]
    rmax_bc = jnp.concatenate([m * ones16 for m in maxs], axis=-1)     # (TM, 64)
    pdc = pd - rmax_bc
    e = jnp.exp(pdc)

    # Fused segment matmul: one (TM,128)x(128,128) MXU pass producing
    #   lanes [0,64):  per-side softmax sums broadcast over their 16 group lanes
    #   lanes [64,68): per-side expectation numerators  sum_b e_b * b
    #   lanes [68,72): per-side softmax sums (compact denominators)
    lhs = jnp.concatenate([e, e * binv], axis=-1)                      # (TM, 128)
    fused = jnp.dot(lhs, segmat_ref[...], preferred_element_type=jnp.float32)
    ssum_bc = fused[:, 0:DW]
    distb = fused[:, DW:DW + 4] / fused[:, DW + 4:DW + 8]              # (TM, 4) ltrb
    logp = pdc - jnp.log(ssum_bc)                                      # log-softmax

    dl, dt = distb[:, 0:1], distb[:, 1:2]
    dr, db = distb[:, 2:3], distb[:, 3:4]
    px1, py1 = ax - dl, ay - dt
    px2, py2 = ax + dr, ay + db
    iw = jnp.maximum(jnp.minimum(px2, tx2) - jnp.maximum(px1, tx1), 0.0)
    ih = jnp.maximum(jnp.minimum(py2, ty2) - jnp.maximum(py1, ty1), 0.0)
    inter = iw * ih
    union = (px2 - px1) * (py2 - py1) + (tx2 - tx1) * (ty2 - ty1) - inter + 1e-7
    iou = inter / union
    # TODO(synk): ultralytics uses CIoU (center-distance + aspect penalty); plain IoU here.
    box_rows = (1.0 - iou) * wfg                                       # (TM, 1)

    # BCE-with-logits on the 16 class lanes; padded lanes masked by clsmask.
    bce = (jnp.maximum(pc, 0.0) - pc * tsc
           + jnp.log(1.0 + jnp.exp(-jnp.abs(pc)))) * clsmask           # (TM, 16)

    # DFL soft cross-entropy; side-mean (0.25) and per-anchor weight folded in.
    dfl_rows = dflw * logp * (wfg * -0.25)                             # (TM, 64)

    # Per-step: sublane-axis reductions only, added into fixed lanes of the
    # single lane-shaped accumulator.
    partial = jnp.concatenate([
        jnp.sum(dfl_rows, axis=0, keepdims=True),                      # lanes [0,64)
        jnp.sum(bce, axis=0, keepdims=True),                           # lanes [64,80)
        jnp.sum(box_rows, axis=0, keepdims=True),                      # lane 80
        jnp.sum(wgt, axis=0, keepdims=True),                           # lane 81
        jnp.zeros((1, ACC_PAD), jnp.float32)], axis=-1)                # pad to 128
    acc_ref[...] += partial

    @pl.when(step == pl.num_programs(0) - 1)
    def _():
        acc = acc_ref[...]
        dfl_total = jnp.sum(acc[:, ACC_DFL0:ACC_DFL0 + DW], axis=-1, keepdims=True)
        cls_total = jnp.sum(acc[:, ACC_CLS0:ACC_CLS0 + NCT], axis=-1, keepdims=True)
        box_total = acc[:, ACC_BOX:ACC_BOX + 1]
        tss = jnp.maximum(acc[:, ACC_W:ACC_W + 1], 1.0)
        inv = 1.0 / tss
        lb = box_total * inv * BOX_GAIN
        lc = cls_total * inv * CLS_GAIN
        ld = dfl_total * inv * DFL_GAIN
        tot = (lb + lc + ld) * float(B)
        out_ref[...] = jnp.concatenate(
            [tot, lb, lc, ld, jnp.zeros((1, NOP - 4), jnp.float32)], axis=-1)


def run_fused(patches, w1, b1, w2, b2, tsc, dflw, meta, segmat, cvec):
    n_tiles = BA // TM
    row = lambda i: (i, 0)     # row-tiled streamed operands
    rep = lambda i: (0, 0)     # resident weights / constants
    return pl.pallas_call(
        fused_yolo_loss_kernel,
        out_shape=jax.ShapeDtypeStruct((1, NOP), jnp.float32),
        grid=(n_tiles,),
        in_specs=[
            pl.BlockSpec((TM, CKP), row),      # patches (bf16)
            pl.BlockSpec((CKP, C1), rep),      # w1 (bf16)
            pl.BlockSpec((1, C1), rep),        # b1 (f32)
            pl.BlockSpec((C1, NOP), rep),      # w2 (bf16)
            pl.BlockSpec((1, NOP), rep),       # b2 (f32)
            pl.BlockSpec((TM, NCT), row),      # target scores
            pl.BlockSpec((TM, DW), row),       # DFL soft targets
            pl.BlockSpec((TM, 8), row),        # per-anchor meta
            pl.BlockSpec((NOP, NOP), rep),     # fused segment matrix (const)
            pl.BlockSpec((1, NOP), rep),       # bin indices + class mask (const)
        ],
        out_specs=pl.BlockSpec((1, NOP), rep),
        scratch_shapes=[pltpu.VMEM((1, NOP), jnp.float32)],
        compiler_params=pltpu.CompilerParams(
            # TODO(synk): at real scale add a leading "parallel" axis (per-core
            # partial losses reduced in the wrapper) so both v7x TensorCores run.
            dimension_semantics=("arbitrary",),
            vmem_limit_bytes=32 * 1024 * 1024),
    )(patches, w1, b1, w2, b2, tsc, dflw, meta, segmat, cvec)


# ----------------------------- plain-JAX glue --------------------------------
def build_constants():
    """Hoisted in-kernel constants: fused segment matmul RHS and bin/mask row."""
    lane = jnp.arange(DW)
    side = lane // REG_MAX
    onehot_side = jax.nn.one_hot(side, 4, dtype=jnp.float32)            # (64, 4)
    seg = (side[:, None] == side[None, :]).astype(jnp.float32)          # (64, 64)
    segmat = jnp.zeros((NOP, NOP), jnp.float32)
    segmat = segmat.at[0:DW, 0:DW].set(seg)                   # ssum broadcast block
    segmat = segmat.at[DW:NOP, DW:DW + 4].set(onehot_side)    # expectation numerators
    segmat = segmat.at[0:DW, DW + 4:DW + 8].set(onehot_side)  # compact denominators
    binv = (lane % REG_MAX).astype(jnp.float32)
    clsmask = (jnp.arange(NCT) < NC).astype(jnp.float32)
    cvec = jnp.concatenate(
        [binv, clsmask, jnp.zeros((NOP - DW - NCT,), jnp.float32)])[None, :]
    return segmat, cvec


def im2col(x):
    """x: (B, C, H, W) NCHW -> (B*Hf*Wf, CKP) bf16 patches for 3x3/s2/p1 conv."""
    # TODO(synk): at real image sizes build patches in-kernel (memory_space=pl.ANY +
    # async copies) to avoid the ~9x HBM read amplification (matters most on v5e).
    xp = jnp.pad(x, ((0, 0), (0, 0), (PAD, PAD), (PAD, PAD)))
    cols = []
    for di in range(K):
        for dj in range(K):
            cols.append(xp[:, :, di:di + HF * STRIDE:STRIDE,
                           dj:dj + WF * STRIDE:STRIDE])
    p = jnp.stack(cols, axis=2)                  # (B, C, K*K, Hf, Wf)
    p = p.transpose(0, 3, 4, 1, 2).reshape(BA, CK)
    p = jnp.pad(p, ((0, 0), (0, CKP - CK)))      # contraction dim 27 -> 32
    return p.astype(jnp.bfloat16)


def init_params(key):
    k1, k2, k3, k4 = jax.random.split(key, 4)
    conv_w = jax.random.normal(k1, (C1, CIN, K, K), jnp.float32) * 0.1
    w1 = jnp.pad(conv_w.reshape(C1, CK).T, ((0, CKP - CK), (0, 0)))     # (CKP, C1)
    b1 = jax.random.normal(k2, (1, C1), jnp.float32) * 0.1
    w2 = jax.random.normal(k3, (C1, NO), jnp.float32) * 0.1
    w2 = jnp.pad(w2, ((0, 0), (0, NOP - NO)))                           # (C1, NOP)
    b2 = jax.random.normal(k4, (1, NO), jnp.float32) * 0.1
    b2 = jnp.pad(b2, ((0, 0), (0, NOP - NO)))                           # (1, NOP)
    return w1.astype(jnp.bfloat16), b1, w2.astype(jnp.bfloat16), b2


def build_targets(batch_idx, cls, bboxes):
    """Per-anchor training targets from (batch_idx, cls, normalized cxcywh)."""
    # TODO(synk): TaskAlignedAssigner replaced by hard center-cell assignment with
    # one-hot scores; GT boxes mapping to the same cell: last write wins.
    b = batch_idx.astype(jnp.int32)
    c = cls.astype(jnp.int32)
    xy = bboxes[:, :2] * IMG
    wh = bboxes[:, 2:] * IMG
    xyxy = jnp.concatenate([xy - wh / 2, xy + wh / 2], axis=-1) / STRIDE   # grid units
    cell = jnp.clip(jnp.floor(xy / STRIDE), 0, HF - 1).astype(jnp.int32)
    aidx = cell[:, 1] * WF + cell[:, 0]
    flat = b * A + aidx

    axc = jnp.arange(WF, dtype=jnp.float32) + 0.5
    ayc = jnp.arange(HF, dtype=jnp.float32) + 0.5
    gx, gy = jnp.meshgrid(axc, ayc)
    anchor_points = jnp.stack([gx.reshape(-1), gy.reshape(-1)], axis=-1)   # (A, 2)
    anchors = jnp.tile(anchor_points, (B, 1))                              # (BA, 2)

    fg = jnp.zeros((BA,), jnp.float32).at[flat].set(1.0)
    tsc = jnp.zeros((BA, NCT), jnp.float32).at[flat, c].set(1.0)
    tboxes = jnp.zeros((BA, 4), jnp.float32).at[flat].set(xyxy)
    weight = jnp.sum(tsc, axis=-1, keepdims=True)                          # (BA, 1)

    # meta: [anchor_x, anchor_y, x1, y1, x2, y2, fg, weight]  -> (BA, 8)
    meta = jnp.concatenate([anchors, tboxes, fg[:, None], weight], axis=-1)

    anc_t = anchor_points[aidx]
    lt = anc_t - xyxy[:, :2]
    rb = xyxy[:, 2:] - anc_t
    ltrb = jnp.clip(jnp.concatenate([lt, rb], axis=-1), 0.0, REG_MAX - 1 - 0.01)
    tl = jnp.floor(ltrb).astype(jnp.int32)
    wl = (tl.astype(jnp.float32) + 1.0) - ltrb
    wr = 1.0 - wl
    dflw_t = (wl[..., None] * jax.nn.one_hot(tl, REG_MAX, dtype=jnp.float32)
              + wr[..., None] * jax.nn.one_hot(tl + 1, REG_MAX, dtype=jnp.float32))
    dflw = jnp.zeros((BA, 4, REG_MAX), jnp.float32).at[flat].set(dflw_t)
    dflw = dflw.reshape(BA, DW)                                            # lane-dense 2-D
    return tsc, meta, dflw


def yolo_loss_wrapper_forward(x, targets, params, consts):
    """Mirrors PyTorchYoloLossWrapper.forward, training branch."""
    # target -> dict fields, exactly as the wrapper does
    batch_idx = targets[:, 0]
    bboxes = targets[:, 2:6]
    cls = targets[:, 1]
    # 'img' = x

    w1, b1, w2, b2 = params
    segmat, cvec = consts
    patches = im2col(x)
    tsc, meta, dflw = build_targets(batch_idx, cls, bboxes)
    res = run_fused(patches, w1, b1, w2, b2, tsc, dflw, meta, segmat, cvec)  # (1, NOP)

    # TODO(synk): inference branch (DetectionPredictor.postprocess / NMS) has no clean
    # Pallas equivalent and is not implemented.
    return {"loss_total": res[0, 0],
            "loss_box": res[0, 1],
            "loss_cls": res[0, 2],
            "loss_dfl": res[0, 3]}


# ----------------------------------- main ------------------------------------
if __name__ == "__main__":
    key = jax.random.PRNGKey(0)
    kp, kx = jax.random.split(key)
    params = init_params(kp)
    consts = build_constants()
    x = jax.random.uniform(kx, (B, CIN, IMG, IMG), jnp.float32)
    # targets rows: (batch_idx, cls, cx, cy, w, h) with normalized cxcywh boxes
    targets = jnp.array([
        [0.0, 1.0, 0.25, 0.25, 0.20, 0.30],
        [0.0, 4.0, 0.70, 0.60, 0.30, 0.20],
        [1.0, 2.0, 0.50, 0.50, 0.40, 0.40],
        [1.0, 7.0, 0.80, 0.20, 0.15, 0.25],
    ], dtype=jnp.float32)

    fwd = jax.jit(yolo_loss_wrapper_forward)
    out = fwd(x, targets, params, consts)
    jax.block_until_ready(out)
    assert all(jnp.isfinite(v) for v in out.values())
    print("KERNEL_OK")
</pallas_src>

<mosaic_0001>
module attributes {stable_mosaic.version = 11 : i64} {
  func.func @fused_yolo_loss_kernel(%arg0: i32, %arg1: memref<128x32xbf16, #tpu.memory_space<vmem>>, %arg2: memref<32x32xbf16, #tpu.memory_space<vmem>>, %arg3: memref<1x32xf32, #tpu.memory_space<vmem>>, %arg4: memref<32x128xbf16, #tpu.memory_space<vmem>>, %arg5: memref<1x128xf32, #tpu.memory_space<vmem>>, %arg6: memref<128x16xf32, #tpu.memory_space<vmem>>, %arg7: memref<128x64xf32, #tpu.memory_space<vmem>>, %arg8: memref<128x8xf32, #tpu.memory_space<vmem>>, %arg9: memref<128x128xf32, #tpu.memory_space<vmem>>, %arg10: memref<1x128xf32, #tpu.memory_space<vmem>>, %arg11: memref<1x128xf32, #tpu.memory_space<vmem>>, %arg12: memref<1x128xf32, #tpu.memory_space<vmem>>) attributes {dimension_semantics = [#tpu.dimension_semantics<arbitrary>], iteration_bounds = array<i64: 1>, scalar_prefetch = 0 : i64, scratch_operands = 1 : i64, tpu.core_type = #tpu.core_type<tc>, window_params = [{transform_indices = @transform_0, window_bounds = array<i64: 128, 32>}, {pipeline_mode = #tpu.pipeline_mode<synchronous>, transform_indices = @transform_1, window_bounds = array<i64: 32, 32>}, {pipeline_mode = #tpu.pipeline_mode<synchronous>, transform_indices = @transform_2, window_bounds = array<i64: 1, 32>}, {pipeline_mode = #tpu.pipeline_mode<synchronous>, transform_indices = @transform_3, window_bounds = array<i64: 32, 128>}, {pipeline_mode = #tpu.pipeline_mode<synchronous>, transform_indices = @transform_4, window_bounds = array<i64: 1, 128>}, {transform_indices = @transform_5, window_bounds = array<i64: 128, 16>}, {transform_indices = @transform_6, window_bounds = array<i64: 128, 64>}, {transform_indices = @transform_7, window_bounds = array<i64: 128, 8>}, {pipeline_mode = #tpu.pipeline_mode<synchronous>, transform_indices = @transform_8, window_bounds = array<i64: 128, 128>}, {pipeline_mode = #tpu.pipeline_mode<synchronous>, transform_indices = @transform_9, window_bounds = array<i64: 1, 128>}, {pipeline_mode = #tpu.pipeline_mode<synchronous>, transform_indices = @transform_10, window_bounds = array<i64: 1, 128>}]} {
    %c0_i32 = arith.constant 0 : i32
    %0 = arith.cmpi eq, %arg0, %c0_i32 : i32
    %1 = arith.extui %0 : i1 to i32
    %c0_i32_0 = arith.constant 0 : i32
    %2 = arith.cmpi ne, %1, %c0_i32_0 : i32
    scf.if %2 {
      %cst_50 = arith.constant 0.000000e+00 : f32
      %146 = vector.broadcast %cst_50 : f32 to vector<1x128xf32>
      %c0_51 = arith.constant 0 : index
      %c0_52 = arith.constant 0 : index
      %147 = vector.load %arg12[%c0_51, %c0_52] : memref<1x128xf32, #tpu.memory_space<vmem>>, vector<1x128xf32>
      tpu.vector_store %arg12[%c0_51, %c0_52], %146 {strides = array<i32>} : memref<1x128xf32, #tpu.memory_space<vmem>>, vector<1x128xf32>,
    } else {
    }
    %c0 = arith.constant 0 : index
    %c0_1 = arith.constant 0 : index
    %3 = vector.load %arg1[%c0, %c0_1] : memref<128x32xbf16, #tpu.memory_space<vmem>>, vector<128x32xbf16>
    %c0_2 = arith.constant 0 : index
    %c0_3 = arith.constant 0 : index
    %4 = vector.load %arg2[%c0_2, %c0_3] : memref<32x32xbf16, #tpu.memory_space<vmem>>, vector<32x32xbf16>
    %cst = arith.constant dense<0.000000e+00> : vector<128x32xf32>
    %5 = tpu.matmul %3, %4, %cst {dimension_numbers = #tpu.dot_dimension_numbers<[1], [0], [0], [1], [0, 0, 1, 1], [], []>} : vector<128x32xbf16>, vector<32x32xbf16>, vector<128x32xf32> -> vector<128x32xf32>
    %c0_4 = arith.constant 0 : index
    %c0_5 = arith.constant 0 : index
    %6 = vector.load %arg3[%c0_4, %c0_5] : memref<1x32xf32, #tpu.memory_space<vmem>>, vector<1x32xf32>
    %7 = vector.broadcast %6 : vector<1x32xf32> to vector<128x32xf32>
    %8 = arith.addf %5, %7 : vector<128x32xf32>
    %cst_6 = arith.constant 5.000000e-01 : f32
    %9 = vector.broadcast %cst_6 : f32 to vector<128x32xf32>
    %10 = arith.mulf %9, %8 : vector<128x32xf32>
    %11 = math.tanh %10 : vector<128x32xf32>
    %cst_7 = arith.constant 5.000000e-01 : f32
    %12 = vector.broadcast %cst_7 : f32 to vector<128x32xf32>
    %13 = arith.mulf %12, %11 : vector<128x32xf32>
    %cst_8 = arith.constant 5.000000e-01 : f32
    %14 = vector.broadcast %cst_8 : f32 to vector<128x32xf32>
    %15 = arith.addf %13, %14 : vector<128x32xf32>
    %16 = arith.mulf %8, %15 : vector<128x32xf32>
    %17 = arith.truncf %16 : vector<128x32xf32> to vector<128x32xbf16>
    %c0_9 = arith.constant 0 : index
    %c0_10 = arith.constant 0 : index
    %18 = vector.load %arg4[%c0_9, %c0_10] : memref<32x128xbf16, #tpu.memory_space<vmem>>, vector<32x128xbf16>
    %cst_11 = arith.constant dense<0.000000e+00> : vector<128x128xf32>
    %19 = tpu.matmul %17, %18, %cst_11 {dimension_numbers = #tpu.dot_dimension_numbers<[1], [0], [0], [1], [0, 0, 1, 1], [], []>} : vector<128x32xbf16>, vector<32x128xbf16>, vector<128x128xf32> -> vector<128x128xf32>
    %c0_12 = arith.constant 0 : index
    %c0_13 = arith.constant 0 : index
    %20 = vector.load %arg5[%c0_12, %c0_13] : memref<1x128xf32, #tpu.memory_space<vmem>>, vector<1x128xf32>
    %21 = vector.broadcast %20 : vector<1x128xf32> to vector<128x128xf32>
    %22 = arith.addf %19, %21 : vector<128x128xf32>
    %23 = vector.extract_strided_slice %22 {offsets = [0, 0], sizes = [128, 64], strides = [1, 1]} : vector<128x128xf32> to vector<128x64xf32>
    %24 = vector.extract_strided_slice %22 {offsets = [0, 64], sizes = [128, 16], strides = [1, 1]} : vector<128x128xf32> to vector<128x16xf32>
    %c0_14 = arith.constant 0 : index
    %c0_15 = arith.constant 0 : index
    %25 = vector.load %arg6[%c0_14, %c0_15] : memref<128x16xf32, #tpu.memory_space<vmem>>, vector<128x16xf32>
    %c0_16 = arith.constant 0 : index
    %c0_17 = arith.constant 0 : index
    %26 = vector.load %arg7[%c0_16, %c0_17] : memref<128x64xf32, #tpu.memory_space<vmem>>, vector<128x64xf32>
    %c0_18 = arith.constant 0 : index
    %c0_19 = arith.constant 0 : index
    %27 = vector.load %arg8[%c0_18, %c0_19] : memref<128x8xf32, #tpu.memory_space<vmem>>, vector<128x8xf32>
    %c0_20 = arith.constant 0 : index
    %c0_21 = arith.constant 0 : index
    %28 = vector.load %arg10[%c0_20, %c0_21] : memref<1x128xf32, #tpu.memory_space<vmem>>, vector<1x64xf32>
    %c0_22 = arith.constant 0 : index
    %c64 = arith.constant 64 : index
    %29 = vector.load %arg10[%c0_22, %c64] : memref<1x128xf32, #tpu.memory_space<vmem>>, vector<1x16xf32>
    %30 = vector.extract_strided_slice %27 {offsets = [0, 0], sizes = [128, 1], strides = [1, 1]} : vector<128x8xf32> to vector<128x1xf32>
    %31 = vector.extract_strided_slice %27 {offsets = [0, 1], sizes = [128, 1], strides = [1, 1]} : vector<128x8xf32> to vector<128x1xf32>
    %32 = vector.extract_strided_slice %27 {offsets = [0, 2], sizes = [128, 1], strides = [1, 1]} : vector<128x8xf32> to vector<128x1xf32>
    %33 = vector.extract_strided_slice %27 {offsets = [0, 3], sizes = [128, 1], strides = [1, 1]} : vector<128x8xf32> to vector<128x1xf32>
    %34 = vector.extract_strided_slice %27 {offsets = [0, 4], sizes = [128, 1], strides = [1, 1]} : vector<128x8xf32> to vector<128x1xf32>
    %35 = vector.extract_strided_slice %27 {offsets = [0, 5], sizes = [128, 1], strides = [1, 1]} : vector<128x8xf32> to vector<128x1xf32>
    %36 = vector.extract_strided_slice %27 {offsets = [0, 6], sizes = [128, 1], strides = [1, 1]} : vector<128x8xf32> to vector<128x1xf32>
    %37 = vector.extract_strided_slice %27 {offsets = [0, 7], sizes = [128, 1], strides = [1, 1]} : vector<128x8xf32> to vector<128x1xf32>
    %38 = arith.mulf %37, %36 : vector<128x1xf32>
    %cst_23 = arith.constant 1.000000e+00 : f32
    %39 = vector.broadcast %cst_23 : f32 to vector<1x16xf32>
    %40 = vector.extract_strided_slice %23 {offsets = [0, 0], sizes = [128, 16], strides = [1, 1]} : vector<128x64xf32> to vector<128x16xf32>
    %cst_24 = arith.constant dense<0xFF800000> : vector<128xf32>
    %41 = vector.multi_reduction <maximumf>, %40, %cst_24 [1] : vector<128x16xf32> to vector<128xf32>
    %42 = vector.shape_cast %41 : vector<128xf32> to vector<128x1xf32>
    %43 = vector.extract_strided_slice %23 {offsets = [0, 16], sizes = [128, 16], strides = [1, 1]} : vector<128x64xf32> to vector<128x16xf32>
    %cst_25 = arith.constant dense<0xFF800000> : vector<128xf32>
    %44 = vector.multi_reduction <maximumf>, %43, %cst_25 [1] : vector<128x16xf32> to vector<128xf32>
    %45 = vector.shape_cast %44 : vector<128xf32> to vector<128x1xf32>
    %46 = vector.extract_strided_slice %23 {offsets = [0, 32], sizes = [128, 16], strides = [1, 1]} : vector<128x64xf32> to vector<128x16xf32>
    %cst_26 = arith.constant dense<0xFF800000> : vector<128xf32>
    %47 = vector.multi_reduction <maximumf>, %46, %cst_26 [1] : vector<128x16xf32> to vector<128xf32>
    %48 = vector.shape_cast %47 : vector<128xf32> to vector<128x1xf32>
    %49 = vector.extract_strided_slice %23 {offsets = [0, 48], sizes = [128, 16], strides = [1, 1]} : vector<128x64xf32> to vector<128x16xf32>
    %cst_27 = arith.constant dense<0xFF800000> : vector<128xf32>
    %50 = vector.multi_reduction <maximumf>, %49, %cst_27 [1] : vector<128x16xf32> to vector<128xf32>
    %51 = vector.shape_cast %50 : vector<128xf32> to vector<128x1xf32>
    %52 = vector.broadcast %42 : vector<128x1xf32> to vector<128x16xf32>
    %53 = vector.broadcast %39 : vector<1x16xf32> to vector<128x16xf32>
    %54 = arith.mulf %52, %53 : vector<128x16xf32>
    %55 = vector.broadcast %45 : vector<128x1xf32> to vector<128x16xf32>
    %56 = vector.broadcast %39 : vector<1x16xf32> to vector<128x16xf32>
    %57 = arith.mulf %55, %56 : vector<128x16xf32>
    %58 = vector.broadcast %48 : vector<128x1xf32> to vector<128x16xf32>
    %59 = vector.broadcast %39 : vector<1x16xf32> to vector<128x16xf32>
    %60 = arith.mulf %58, %59 : vector<128x16xf32>
    %61 = vector.broadcast %51 : vector<128x1xf32> to vector<128x16xf32>
    %62 = vector.broadcast %39 : vector<1x16xf32> to vector<128x16xf32>
    %63 = arith.mulf %61, %62 : vector<128x16xf32>
    %64 = tpu.concatenate %54, %57, %60, %63 in 1 : vector<128x16xf32>, vector<128x16xf32>, vector<128x16xf32>, vector<128x16xf32> -> vector<128x64xf32>
    %65 = arith.subf %23, %64 : vector<128x64xf32>
    %66 = math.exp %65 : vector<128x64xf32>
    %67 = vector.broadcast %28 : vector<1x64xf32> to vector<128x64xf32>
    %68 = arith.mulf %66, %67 : vector<128x64xf32>
    %69 = tpu.concatenate %66, %68 in 1 : vector<128x64xf32>, vector<128x64xf32> -> vector<128x128xf32>
    %c0_28 = arith.constant 0 : index
    %c0_29 = arith.constant 0 : index
    %70 = vector.load %arg9[%c0_28, %c0_29] : memref<128x128xf32, #tpu.memory_space<vmem>>, vector<128x128xf32>
    %cst_30 = arith.constant dense<0.000000e+00> : vector<128x128xf32>
    %71 = tpu.matmul %69, %70, %cst_30 {dimension_numbers = #tpu.dot_dimension_numbers<[1], [0], [0], [1], [0, 0, 1, 1], [], []>} : vector<128x128xf32>, vector<128x128xf32>, vector<128x128xf32> -> vector<128x128xf32>
    %72 = vector.extract_strided_slice %71 {offsets = [0, 0], sizes = [128, 64], strides = [1, 1]} : vector<128x128xf32> to vector<128x64xf32>
    %73 = vector.extract_strided_slice %71 {offsets = [0, 64], sizes = [128, 4], strides = [1, 1]} : vector<128x128xf32> to vector<128x4xf32>
    %74 = vector.extract_strided_slice %71 {offsets = [0, 68], sizes = [128, 4], strides = [1, 1]} : vector<128x128xf32> to vector<128x4xf32>
    %75 = arith.divf %73, %74 : vector<128x4xf32>
    %76 = math.log %72 : vector<128x64xf32>
    %77 = arith.subf %65, %76 : vector<128x64xf32>
    %78 = vector.extract_strided_slice %75 {offsets = [0, 0], sizes = [128, 1], strides = [1, 1]} : vector<128x4xf32> to vector<128x1xf32>
    %79 = vector.extract_strided_slice %75 {offsets = [0, 1], sizes = [128, 1], strides = [1, 1]} : vector<128x4xf32> to vector<128x1xf32>
    %80 = vector.extract_strided_slice %75 {offsets = [0, 2], sizes = [128, 1], strides = [1, 1]} : vector<128x4xf32> to vector<128x1xf32>
    %81 = vector.extract_strided_slice %75 {offsets = [0, 3], sizes = [128, 1], strides = [1, 1]} : vector<128x4xf32> to vector<128x1xf32>
    %82 = arith.subf %30, %78 : vector<128x1xf32>
    %83 = arith.subf %31, %79 : vector<128x1xf32>
    %84 = arith.addf %30, %80 : vector<128x1xf32>
    %85 = arith.addf %31, %81 : vector<128x1xf32>
    %86 = arith.minimumf %84, %34 : vector<128x1xf32>
    %87 = arith.maximumf %82, %32 : vector<128x1xf32>
    %88 = arith.subf %86, %87 : vector<128x1xf32>
    %cst_31 = arith.constant 0.000000e+00 : f32
    %89 = vector.broadcast %cst_31 : f32 to vector<128x1xf32>
    %90 = arith.maximumf %88, %89 : vector<128x1xf32>
    %91 = arith.minimumf %85, %35 : vector<128x1xf32>
    %92 = arith.maximumf %83, %33 : vector<128x1xf32>
    %93 = arith.subf %91, %92 : vector<128x1xf32>
    %cst_32 = arith.constant 0.000000e+00 : f32
    %94 = vector.broadcast %cst_32 : f32 to vector<128x1xf32>
    %95 = arith.maximumf %93, %94 : vector<128x1xf32>
    %96 = arith.mulf %90, %95 : vector<128x1xf32>
    %97 = arith.subf %84, %82 : vector<128x1xf32>
    %98 = arith.subf %85, %83 : vector<128x1xf32>
    %99 = arith.mulf %97, %98 : vector<128x1xf32>
    %100 = arith.subf %34, %32 : vector<128x1xf32>
    %101 = arith.subf %35, %33 : vector<128x1xf32>
    %102 = arith.mulf %100, %101 : vector<128x1xf32>
    %103 = arith.addf %99, %102 : vector<128x1xf32>
    %104 = arith.subf %103, %96 : vector<128x1xf32>
    %cst_33 = arith.constant 1.000000e-07 : f32
    %105 = vector.broadcast %cst_33 : f32 to vector<128x1xf32>
    %106 = arith.addf %104, %105 : vector<128x1xf32>
    %107 = arith.divf %96, %106 : vector<128x1xf32>
    %cst_34 = arith.constant 1.000000e+00 : f32
    %108 = vector.broadcast %cst_34 : f32 to vector<128x1xf32>
    %109 = arith.subf %108, %107 : vector<128x1xf32>
    %110 = arith.mulf %109, %38 : vector<128x1xf32>
    %cst_35 = arith.constant 0.000000e+00 : f32
    %111 = vector.broadcast %cst_35 : f32 to vector<128x16xf32>
    %112 = arith.maximumf %24, %111 : vector<128x16xf32>
    %113 = arith.mulf %24, %25 : vector<128x16xf32>
    %114 = arith.subf %112, %113 : vector<128x16xf32>
    %115 = math.absf %24 : vector<128x16xf32>
    %cst_36 = arith.constant 0.000000e+00 : f32
    %116 = vector.broadcast %cst_36 : f32 to vector<128x16xf32>
    %117 = arith.subf %116, %115 : vector<128x16xf32>
    %118 = math.exp %117 : vector<128x16xf32>
    %cst_37 = arith.constant 1.000000e+00 : f32
    %119 = vector.broadcast %cst_37 : f32 to vector<128x16xf32>
    %120 = arith.addf %119, %118 : vector<128x16xf32>
    %121 = math.log %120 : vector<128x16xf32>
    %122 = arith.addf %114, %121 : vector<128x16xf32>
    %123 = vector.broadcast %29 : vector<1x16xf32> to vector<128x16xf32>
    %124 = arith.mulf %122, %123 : vector<128x16xf32>
    %125 = arith.mulf %26, %77 : vector<128x64xf32>
    %cst_38 = arith.constant -2.500000e-01 : f32
    %126 = vector.broadcast %cst_38 : f32 to vector<128x1xf32>
    %127 = arith.mulf %38, %126 : vector<128x1xf32>
    %128 = vector.broadcast %127 : vector<128x1xf32> to vector<128x64xf32>
    %129 = arith.mulf %125, %128 : vector<128x64xf32>
    %cst_39 = arith.constant dense<0.000000e+00> : vector<64xf32>
    %130 = vector.multi_reduction <add>, %129, %cst_39 [0] : vector<128x64xf32> to vector<64xf32>
    %131 = vector.shape_cast %130 : vector<64xf32> to vector<1x64xf32>
    %cst_40 = arith.constant dense<0.000000e+00> : vector<16xf32>
    %132 = vector.multi_reduction <add>, %124, %cst_40 [0] : vector<128x16xf32> to vector<16xf32>
    %133 = vector.shape_cast %132 : vector<16xf32> to vector<1x16xf32>
    %cst_41 = arith.constant dense<0.000000e+00> : vector<1xf32>
    %134 = vector.multi_reduction <add>, %110, %cst_41 [0] : vector<128x1xf32> to vector<1xf32>
    %135 = vector.shape_cast %134 : vector<1xf32> to vector<1x1xf32>
    %cst_42 = arith.constant dense<0.000000e+00> : vector<1xf32>
    %136 = vector.multi_reduction <add>, %37, %cst_42 [0] : vector<128x1xf32> to vector<1xf32>
    %137 = vector.shape_cast %136 : vector<1xf32> to vector<1x1xf32>
    %cst_43 = arith.constant 0.000000e+00 : f32
    %138 = vector.broadcast %cst_43 : f32 to vector<1x46xf32>
    %139 = tpu.concatenate %131, %133, %135, %137, %138 in 1 : vector<1x64xf32>, vector<1x16xf32>, vector<1x1xf32>, vector<1x1xf32>, vector<1x46xf32> -> vector<1x128xf32>
    %c0_44 = arith.constant 0 : index
    %c0_45 = arith.constant 0 : index
    %140 = vector.load %arg12[%c0_44, %c0_45] : memref<1x128xf32, #tpu.memory_space<vmem>>, vector<1x128xf32>
    %141 = arith.addf %140, %139 : vector<1x128xf32>
    %c0_46 = arith.constant 0 : index
    %c0_47 = arith.constant 0 : index
    %142 = vector.load %arg12[%c0_46, %c0_47] : memref<1x128xf32, #tpu.memory_space<vmem>>, vector<1x128xf32>
    tpu.vector_store %arg12[%c0_46, %c0_47], %141 {strides = array<i32>} : memref<1x128xf32, #tpu.memory_space<vmem>>, vector<1x128xf32>,
    %c0_i32_48 = arith.constant 0 : i32
    %143 = arith.cmpi eq, %arg0, %c0_i32_48 : i32
    %144 = arith.extui %143 : i1 to i32
    %c0_i32_49 = arith.constant 0 : i32
    %145 = arith.cmpi ne, %144, %c0_i32_49 : i32
    scf.if %145 {
      %c0_50 = arith.constant 0 : index
      %c0_51 = arith.constant 0 : index
      %146 = vector.load %arg12[%c0_50, %c0_51] : memref<1x128xf32, #tpu.memory_space<vmem>>, vector<1x128xf32>
      %147 = vector.extract_strided_slice %146 {offsets = [0, 0], sizes = [1, 64], strides = [1, 1]} : vector<1x128xf32> to vector<1x64xf32>
      %cst_52 = arith.constant dense<0.000000e+00> : vector<1xf32>
      %148 = vector.multi_reduction <add>, %147, %cst_52 [1] : vector<1x64xf32> to vector<1xf32>
      %149 = vector.shape_cast %148 : vector<1xf32> to vector<1x1xf32>
      %150 = vector.extract_strided_slice %146 {offsets = [0, 64], sizes = [1, 16], strides = [1, 1]} : vector<1x128xf32> to vector<1x16xf32>
      %cst_53 = arith.constant dense<0.000000e+00> : vector<1xf32>
      %151 = vector.multi_reduction <add>, %150, %cst_53 [1] : vector<1x16xf32> to vector<1xf32>
      %152 = vector.shape_cast %151 : vector<1xf32> to vector<1x1xf32>
      %153 = vector.extract_strided_slice %146 {offsets = [0, 80], sizes = [1, 1], strides = [1, 1]} : vector<1x128xf32> to vector<1x1xf32>
      %154 = vector.extract_strided_slice %146 {offsets = [0, 81], sizes = [1, 1], strides = [1, 1]} : vector<1x128xf32> to vector<1x1xf32>
      %cst_54 = arith.constant 1.000000e+00 : f32
      %155 = vector.broadcast %cst_54 : f32 to vector<1x1xf32>
      %156 = arith.maximumf %154, %155 : vector<1x1xf32>
      %cst_55 = arith.constant 1.000000e+00 : f32
      %157 = vector.broadcast %cst_55 : f32 to vector<1x1xf32>
      %158 = arith.divf %157, %156 : vector<1x1xf32>
      %159 = arith.mulf %153, %158 : vector<1x1xf32>
      %cst_56 = arith.constant 7.500000e+00 : f32
      %160 = vector.broadcast %cst_56 : f32 to vector<1x1xf32>
      %161 = arith.mulf %159, %160 : vector<1x1xf32>
      %162 = arith.mulf %152, %158 : vector<1x1xf32>
      %cst_57 = arith.constant 5.000000e-01 : f32
      %163 = vector.broadcast %cst_57 : f32 to vector<1x1xf32>
      %164 = arith.mulf %162, %163 : vector<1x1xf32>
      %165 = arith.mulf %149, %158 : vector<1x1xf32>
      %cst_58 = arith.constant 1.500000e+00 : f32
      %166 = vector.broadcast %cst_58 : f32 to vector<1x1xf32>
      %167 = arith.mulf %165, %166 : vector<1x1xf32>
      %168 = arith.addf %161, %164 : vector<1x1xf32>
      %169 = arith.addf %168, %167 : vector<1x1xf32>
      %cst_59 = arith.constant 2.000000e+00 : f32
      %170 = vector.broadcast %cst_59 : f32 to vector<1x1xf32>
      %171 = arith.mulf %169, %170 : vector<1x1xf32>
      %cst_60 = arith.constant 0.000000e+00 : f32
      %172 = vector.broadcast %cst_60 : f32 to vector<1x124xf32>
      %173 = tpu.concatenate %171, %161, %164, %167, %172 in 1 : vector<1x1xf32>, vector<1x1xf32>, vector<1x1xf32>, vector<1x1xf32>, vector<1x124xf32> -> vector<1x128xf32>
      %c0_61 = arith.constant 0 : index
      %c0_62 = arith.constant 0 : index
      %174 = vector.load %arg11[%c0_61, %c0_62] : memref<1x128xf32, #tpu.memory_space<vmem>>, vector<1x128xf32>
      tpu.vector_store %arg11[%c0_61, %c0_62], %173 {strides = array<i32>} : memref<1x128xf32, #tpu.memory_space<vmem>>, vector<1x128xf32>,
    } else {
    }
    return
  }
  func.func @transform_0(%arg0: i32) -> (i32, i32) {
    %c0_i32 = arith.constant 0 : i32
    %c0_i32_0 = arith.constant 0 : i32
    return %arg0, %c0_i32 : i32, i32
  }
  func.func @transform_1(%arg0: i32) -> (i32, i32) {
    %c0_i32 = arith.constant 0 : i32
    %c0_i32_0 = arith.constant 0 : i32
    %c0_i32_1 = arith.constant 0 : i32
    return %c0_i32, %c0_i32_0 : i32, i32
  }
  func.func @transform_2(%arg0: i32) -> (i32, i32) {
    %c0_i32 = arith.constant 0 : i32
    %c0_i32_0 = arith.constant 0 : i32
    %c0_i32_1 = arith.constant 0 : i32
    return %c0_i32, %c0_i32_0 : i32, i32
  }
  func.func @transform_3(%arg0: i32) -> (i32, i32) {
    %c0_i32 = arith.constant 0 : i32
    %c0_i32_0 = arith.constant 0 : i32
    %c0_i32_1 = arith.constant 0 : i32
    return %c0_i32, %c0_i32_0 : i32, i32
  }
  func.func @transform_4(%arg0: i32) -> (i32, i32) {
    %c0_i32 = arith.constant 0 : i32
    %c0_i32_0 = arith.constant 0 : i32
    %c0_i32_1 = arith.constant 0 : i32
    return %c0_i32, %c0_i32_0 : i32, i32
  }
  func.func @transform_5(%arg0: i32) -> (i32, i32) {
    %c0_i32 = arith.constant 0 : i32
    %c0_i32_0 = arith.constant 0 : i32
    return %arg0, %c0_i32 : i32, i32
  }
  func.func @transform_6(%arg0: i32) -> (i32, i32) {
    %c0_i32 = arith.constant 0 : i32
    %c0_i32_0 = arith.constant 0 : i32
    return %arg0, %c0_i32 : i32, i32
  }
  func.func @transform_7(%arg0: i32) -> (i32, i32) {
    %c0_i32 = arith.constant 0 : i32
    %c0_i32_0 = arith.constant 0 : i32
    return %arg0, %c0_i32 : i32, i32
  }
  func.func @transform_8(%arg0: i32) -> (i32, i32) {
    %c0_i32 = arith.constant 0 : i32
    %c0_i32_0 = arith.constant 0 : i32
    %c0_i32_1 = arith.constant 0 : i32
    return %c0_i32, %c0_i32_0 : i32, i32
  }
  func.func @transform_9(%arg0: i32) -> (i32, i32) {
    %c0_i32 = arith.constant 0 : i32
    %c0_i32_0 = arith.constant 0 : i32
    %c0_i32_1 = arith.constant 0 : i32
    return %c0_i32, %c0_i32_0 : i32, i32
  }
  func.func @transform_10(%arg0: i32) -> (i32, i32) {
    %c0_i32 = arith.constant 0 : i32
    %c0_i32_0 = arith.constant 0 : i32
    %c0_i32_1 = arith.constant 0 : i32
    return %c0_i32, %c0_i32_0 : i32, i32
  }
}

</mosaic_0001>

<llo_original>
// kernel: yolo_loss_wrapper_forward.1
$region0: #{yolo_loss_wrapper_forward.1}
  #allocation0 [shape = 'u32[]', space=smem, size = 0x4, offset = 0x4, fixed_abs, tag = 'smem constant byte address 0x4 - core index']
  #allocation1 [shape = 'u32[72,128]{1,0:T(1,128)}', space=vmem, size = 0x9000, scoped, tag = 'internal scratch']
  #allocation2 [shape = 'f32[1,128]{1,0:T(1,128)}', space=vmem, size = 0x200, scoped, tag = 'scratch operand']
  %s0 = inlined_call_operand.vmem [shape: bf16[128,32], index: 0, kind: input, shape index: {}]
  %s1 = inlined_call_operand.vmem [shape: bf16[32,32], index: 1, kind: input, shape index: {}]
  %s2 = inlined_call_operand.vmem [shape: f32[1,32], index: 2, kind: input, shape index: {}]
  %s3 = inlined_call_operand.vmem [shape: bf16[32,128], index: 3, kind: input, shape index: {}]
  %s4 = inlined_call_operand.vmem [shape: f32[1,128], index: 4, kind: input, shape index: {}]
  %s5 = inlined_call_operand.vmem [shape: f32[128,16], index: 5, kind: input, shape index: {}]
  %s6 = inlined_call_operand.vmem [shape: f32[128,64], index: 6, kind: input, shape index: {}]
  %s7 = inlined_call_operand.vmem [shape: f32[128,8], index: 7, kind: input, shape index: {}]
  %s8 = inlined_call_operand.vmem [shape: f32[128,128], index: 8, kind: input, shape index: {}]
  %s9 = inlined_call_operand.vmem [shape: f32[1,128], index: 9, kind: input, shape index: {}]
  %s10 = inlined_call_operand.vmem [shape: f32[1,128], index: 10, kind: output, shape index: {}]
  %s11 = sld [smem:[#allocation0]]
  $region58: #{yolo_loss_wrapper_forward.1} parent=0
    _
  %s13 = ssub.s32 1, %s11
  %s14 = scalar_select 0, %s13, %s11
  // Predicated region
  $region2: #{yolo_loss_wrapper_forward.1} parent=0 // pred_check
    _
  $region3: #{yolo_loss_wrapper_forward.1} parent=0 // pred_check_branch
    %16 = sbr.rel (0) target = $region5
  $region4: #{yolo_loss_wrapper_forward.1} parent=0 // pred_region
    _
  $region5: #{yolo_loss_wrapper_forward.1} parent=0 // pred_fallthru
    _
  // Predicated region
  $region6: #{yolo_loss_wrapper_forward.1} parent=0 // pred_check
    _
  $region7: #{yolo_loss_wrapper_forward.1} parent=0 // pred_check_branch
    %18 = sbr.rel (0) target = $region9
  $region8: #{yolo_loss_wrapper_forward.1} parent=0 // pred_region
    _
  $region9: #{yolo_loss_wrapper_forward.1} parent=0 // pred_fallthru
    _
  // Predicated region
  $region10: #{yolo_loss_wrapper_forward.1} parent=0 // pred_check
    _
  $region11: #{yolo_loss_wrapper_forward.1} parent=0 // pred_check_branch
    %20 = sbr.rel (0) target = $region13
  $region12: #{yolo_loss_wrapper_forward.1} parent=0 // pred_region
    _
  $region13: #{yolo_loss_wrapper_forward.1} parent=0 // pred_fallthru
    _
  // Predicated region
  $region14: #{yolo_loss_wrapper_forward.1} parent=0 // pred_check
    _
  $region15: #{yolo_loss_wrapper_forward.1} parent=0 // pred_check_branch
    %22 = sbr.rel (0) target = $region17
  $region16: #{yolo_loss_wrapper_forward.1} parent=0 // pred_region
    _
  $region17: #{yolo_loss_wrapper_forward.1} parent=0 // pred_fallthru
    _
  // Predicated region
  $region18: #{yolo_loss_wrapper_forward.1} parent=0 // pred_check
    _
  $region19: #{yolo_loss_wrapper_forward.1} parent=0 // pred_check_branch
    %24 = sbr.rel (0) target = $region21
  $region20: #{yolo_loss_wrapper_forward.1} parent=0 // pred_region
    _
  $region21: #{yolo_loss_wrapper_forward.1} parent=0 // pred_fallthru
    _
  // Predicated region
  $region22: #{yolo_loss_wrapper_forward.1} parent=0 // pred_check
    _
  $region23: #{yolo_loss_wrapper_forward.1} parent=0 // pred_check_branch
    %26 = sbr.rel (0) target = $region25
  $region24: #{yolo_loss_wrapper_forward.1} parent=0 // pred_region
    _
  $region25: #{yolo_loss_wrapper_forward.1} parent=0 // pred_fallthru
    _
  // Predicated region
  $region26: #{yolo_loss_wrapper_forward.1} parent=0 // pred_check
    _
  $region27: #{yolo_loss_wrapper_forward.1} parent=0 // pred_check_branch
    %28 = sbr.rel (0) target = $region29
  $region28: #{yolo_loss_wrapper_forward.1} parent=0 // pred_region
    _
  $region29: #{yolo_loss_wrapper_forward.1} parent=0 // pred_fallthru
    _
  // Predicated region
  $region30: #{yolo_loss_wrapper_forward.1} parent=0 // pred_check
    _
  $region31: #{yolo_loss_wrapper_forward.1} parent=0 // pred_check_branch
    %30 = sbr.rel (0) target = $region33
  $region32: #{yolo_loss_wrapper_forward.1} parent=0 // pred_region
    _
  $region33: #{yolo_loss_wrapper_forward.1} parent=0 // pred_fallthru
    _
  // Predicated region
  $region34: #{yolo_loss_wrapper_forward.1} parent=0 // pred_check
    _
  $region35: #{yolo_loss_wrapper_forward.1} parent=0 // pred_check_branch
    %32 = sbr.rel (0) target = $region37
  $region36: #{yolo_loss_wrapper_forward.1} parent=0 // pred_region
    _
  $region37: #{yolo_loss_wrapper_forward.1} parent=0 // pred_fallthru
    _
  // Predicated region
  $region38: #{yolo_loss_wrapper_forward.1} parent=0 // pred_check
    _
  $region39: #{yolo_loss_wrapper_forward.1} parent=0 // pred_check_branch
    %34 = sbr.rel (0) target = $region41
  $region40: #{yolo_loss_wrapper_forward.1} parent=0 // pred_region
    _
  $region41: #{yolo_loss_wrapper_forward.1} parent=0 // pred_fallthru
    _
  %p36 = scmp.eq.s32.totalorder 0, 0
  // Predicated region
  $region42: #{yolo_loss_wrapper_forward.1} parent=0 // pred_check
    %p37 = pneg %p36
  $region43: #{yolo_loss_wrapper_forward.1} parent=0 // pred_check_branch
    %39 = sbr.rel (%p37) target = $region45
  $region44: #{yolo_loss_wrapper_forward.1} parent=0 // pred_region
    %40 = vst [vmem:[#allocation2] sm:$0x1] 0.0
  $region45: #{yolo_loss_wrapper_forward.1} parent=0 // pred_fallthru
    _
  %v41 = vld [vmem:[%s0] sm:$0xf]
  %v42 = vld [vmem:[%s0 + $0x4] sm:$0xf]
  %v43 = vld [vmem:[%s0 + $0x8] sm:$0xf]
  %v44 = vld [vmem:[%s0 + $0xc] sm:$0xf]
  %v45 = vld [vmem:[%s0 + $0x10] sm:$0xf]
  %v46 = vld [vmem:[%s0 + $0x14] sm:$0xf]
  %v47 = vld [vmem:[%s0 + $0x18] sm:$0xf]
  %v48 = vld [vmem:[%s0 + $0x1c] sm:$0xf]
  %v49 = vld [vmem:[%s0 + $0x20] sm:$0xf]
  %v50 = vld [vmem:[%s0 + $0x24] sm:$0xf]
  %v51 = vld [vmem:[%s0 + $0x28] sm:$0xf]
  %v52 = vld [vmem:[%s0 + $0x2c] sm:$0xf]
  %v53 = vld [vmem:[%s0 + $0x30] sm:$0xf]
  %v54 = vld [vmem:[%s0 + $0x34] sm:$0xf]
  %v55 = vld [vmem:[%s0 + $0x38] sm:$0xf]
  %v56 = vld [vmem:[%s0 + $0x3c] sm:$0xf]
  %v57 = vld [vmem:[%s1] sm:$0xf]
  %v58 = vld [vmem:[%s1 + $0x4] sm:$0xf]
  %v59 = vld [vmem:[%s1 + $0x8] sm:$0xf]
  %v60 = vld [vmem:[%s1 + $0xc] sm:$0xf]
  %v61 = vld [vmem:[%s2] sm:$0x1]
  %v63 = vperm.slane %v61, 0
  %v81 = vunpack.c.l.b16 %v41
  %v82 = vunpack.c.l.b16 %v42
  %v83 = vunpack.c.l.b16 %v43
  %v84 = vunpack.c.l.b16 %v44
  %v85 = vunpack.c.l.b16 %v45
  %v86 = vunpack.c.l.b16 %v46
  %v87 = vunpack.c.l.b16 %v47
  %v88 = vunpack.c.l.b16 %v48
  %v89 = vunpack.c.l.b16 %v49
  %v90 = vunpack.c.l.b16 %v50
  %v91 = vunpack.c.l.b16 %v51
  %v92 = vunpack.c.l.b16 %v52
  %v93 = vunpack.c.l.b16 %v53
  %v94 = vunpack.c.l.b16 %v54
  %v95 = vunpack.c.l.b16 %v55
  %v96 = vunpack.c.l.b16 %v56
  %v97 = vpack.c.b16 %v82, %v81
  %v98 = vpack.c.b16 %v84, %v83
  %v99 = vpack.c.b16 %v86, %v85
  %v100 = vpack.c.b16 %v88, %v87
  %v101 = vpack.c.b16 %v90, %v89
  %v102 = vpack.c.b16 %v92, %v91
  %v103 = vpack.c.b16 %v94, %v93
  %v104 = vpack.c.b16 %v96, %v95
  %v109 = vunpack.c.l.b16 %v57
  %v110 = vunpack.c.l.b16 %v58
  %v111 = vunpack.c.l.b16 %v59
  %v112 = vunpack.c.l.b16 %v60
  %v113 = vpack.c.b16 %v110, %v109
  %v114 = vpack.c.b16 %v112, %v111
  %vm117 = vcmask 261120
  %v119 = vsel %vm117, %v97, 0
  %v122 = vsel %vm117, %v98, 0
  %v125 = vsel %vm117, %v99, 0
  %v128 = vsel %vm117, %v100, 0
  %v131 = vsel %vm117, %v101, 0
  %v134 = vsel %vm117, %v102, 0
  %v137 = vsel %vm117, %v103, 0
  %v140 = vsel %vm117, %v104, 0
  %142 = vmatpush.bf16.msra.mxu0 0
  %143 = vmatpush.bf16.msra.mxu0 0
  %144 = vmatpush.bf16.msra.mxu0 0
  %145 = vmatpush.bf16.msra.mxu0 0
  %146 = vmatpush.bf16.msra.mxu0 0
  %147 = vmatpush.bf16.msra.mxu0 0
  %148 = vmatpush.bf16.msra.mxu0 %v114
  %149 = vmatpush.bf16.msra.mxu0 %v113
  %150 = vmatmul.bf16.gmra.mxu0 %v119
  %v151 = vpop.f32.mrf.mxu0
  %v152 = vadd.f32 %v63, %v151
  %v153 = vpop.f32.mrf.mxu0
  %v154 = vadd.f32 %v63, %v153
  %155 = vmatmul.bf16.gmra.mxu0 %v122
  %v156 = vpop.f32.mrf.mxu0
  %v157 = vadd.f32 %v63, %v156
  %v158 = vpop.f32.mrf.mxu0
  %v159 = vadd.f32 %v63, %v158
  %160 = vmatmul.bf16.gmra.mxu0 %v125
  %v161 = vpop.f32.mrf.mxu0
  %v162 = vadd.f32 %v63, %v161
  %v163 = vpop.f32.mrf.mxu0
  %v164 = vadd.f32 %v63, %v163
  %165 = vmatmul.bf16.gmra.mxu0 %v128
  %v166 = vpop.f32.mrf.mxu0
  %v167 = vadd.f32 %v63, %v166
  %v168 = vpop.f32.mrf.mxu0
  %v169 = vadd.f32 %v63, %v168
  %170 = vmatmul.bf16.gmra.mxu0 %v131
  %v171 = vpop.f32.mrf.mxu0
  %v172 = vadd.f32 %v63, %v171
  %v173 = vpop.f32.mrf.mxu0
  %v174 = vadd.f32 %v63, %v173
  %175 = vmatmul.bf16.gmra.mxu0 %v134
  %v176 = vpop.f32.mrf.mxu0
  %v177 = vadd.f32 %v63, %v176
  %v178 = vpop.f32.mrf.mxu0
  %v179 = vadd.f32 %v63, %v178
  %180 = vmatmul.bf16.gmra.mxu0 %v137
  %v181 = vpop.f32.mrf.mxu0
  %v182 = vadd.f32 %v63, %v181
  %v183 = vpop.f32.mrf.mxu0
  %v184 = vadd.f32 %v63, %v183
  %185 = vmatmul.bf16.gmra.mxu0 %v140
  %v186 = vpop.f32.mrf.mxu0
  %v187 = vadd.f32 %v63, %v186
  %v188 = vpop.f32.mrf.mxu0
  %v189 = vadd.f32 %v63, %v188
  %190 = vdwg.mxu0
  %v191 = vmul.f32 %v152, 0.5
  %v192 = vmul.f32 %v154, 0.5
  %v193 = vmul.f32 %v157, 0.5
  %v194 = vmul.f32 %v159, 0.5
  %v195 = vmul.f32 %v162, 0.5
  %v196 = vmul.f32 %v164, 0.5
  %v197 = vmul.f32 %v167, 0.5
  %v198 = vmul.f32 %v169, 0.5
  %v199 = vmul.f32 %v172, 0.5
  %v200 = vmul.f32 %v174, 0.5
  %v201 = vmul.f32 %v177, 0.5
  %v202 = vmul.f32 %v179, 0.5
  %v203 = vmul.f32 %v182, 0.5
  %v204 = vmul.f32 %v184, 0.5
  %v205 = vmul.f32 %v187, 0.5
  %v206 = vmul.f32 %v189, 0.5
  %v207 = vtanh.pop %v191
  %v208 = vtanh.pop %v192
  %v209 = vtanh.pop %v193
  %v210 = vtanh.pop %v194
  %v211 = vtanh.pop %v195
  %v212 = vtanh.pop %v196
  %v213 = vtanh.pop %v197
  %v214 = vtanh.pop %v198
  %v215 = vtanh.pop %v199
  %v216 = vtanh.pop %v200
  %v217 = vtanh.pop %v201
  %v218 = vtanh.pop %v202
  %v219 = vtanh.pop %v203
  %v220 = vtanh.pop %v204
  %v221 = vtanh.pop %v205
  %v222 = vtanh.pop %v206
  %v223 = vmul.f32 %v207, 0.5
  %v224 = vmul.f32 %v208, 0.5
  %v225 = vmul.f32 %v209, 0.5
  %v226 = vmul.f32 %v210, 0.5
  %v227 = vmul.f32 %v211, 0.5
  %v228 = vmul.f32 %v212, 0.5
  %v229 = vmul.f32 %v213, 0.5
  %v230 = vmul.f32 %v214, 0.5
  %v231 = vmul.f32 %v215, 0.5
  %v232 = vmul.f32 %v216, 0.5
  %v233 = vmul.f32 %v217, 0.5
  %v234 = vmul.f32 %v218, 0.5
  %v235 = vmul.f32 %v219, 0.5
  %v236 = vmul.f32 %v220, 0.5
  %v237 = vmul.f32 %v221, 0.5
  %v238 = vmul.f32 %v222, 0.5
  %v239 = vadd.f32 %v223, 0.5
  %v240 = vadd.f32 %v224, 0.5
  %v241 = vadd.f32 %v225, 0.5
  %v242 = vadd.f32 %v226, 0.5
  %v243 = vadd.f32 %v227, 0.5
  %v244 = vadd.f32 %v228, 0.5
  %v245 = vadd.f32 %v229, 0.5
  %v246 = vadd.f32 %v230, 0.5
  %v247 = vadd.f32 %v231, 0.5
  %v248 = vadd.f32 %v232, 0.5
  %v249 = vadd.f32 %v233, 0.5
  %v250 = vadd.f32 %v234, 0.5
  %v251 = vadd.f32 %v235, 0.5
  %v252 = vadd.f32 %v236, 0.5
  %v253 = vadd.f32 %v237, 0.5
  %v254 = vadd.f32 %v238, 0.5
  %v255 = vmul.f32 %v152, %v239
  %v256 = vmul.f32 %v154, %v240
  %v257 = vmul.f32 %v157, %v241
  %v258 = vmul.f32 %v159, %v242
  %v259 = vmul.f32 %v162, %v243
  %v260 = vmul.f32 %v164, %v244
  %v261 = vmul.f32 %v167, %v245
  %v262 = vmul.f32 %v169, %v246
  %v263 = vmul.f32 %v172, %v247
  %v264 = vmul.f32 %v174, %v248
  %v265 = vmul.f32 %v177, %v249
  %v266 = vmul.f32 %v179, %v250
  %v267 = vmul.f32 %v182, %v251
  %v268 = vmul.f32 %v184, %v252
  %v269 = vmul.f32 %v187, %v253
  %v270 = vmul.f32 %v189, %v254
  %v271 = vpack.c.bf16 %v256, %v255
  %v272 = vpack.c.bf16 %v258, %v257
  %v273 = vpack.c.bf16 %v260, %v259
  %v274 = vpack.c.bf16 %v262, %v261
  %v275 = vpack.c.bf16 %v264, %v263
  %v276 = vpack.c.bf16 %v266, %v265
  %v277 = vpack.c.bf16 %v268, %v267
  %v278 = vpack.c.bf16 %v270, %v269
  %v279 = vld [vmem:[%s3] sm:$0xf]
  %v280 = vld [vmem:[%s3 + $0x4] sm:$0xf]
  %v281 = vld [vmem:[%s3 + $0x8] sm:$0xf]
  %v282 = vld [vmem:[%s3 + $0xc] sm:$0xf]
  %v283 = vld [vmem:[%s4] sm:$0x1]
  %v285 = vperm.slane %v283, 0
  %v291 = vunpack.c.l.b16 %v279
  %v292 = vunpack.c.l.b16 %v280
  %v293 = vunpack.c.l.b16 %v281
  %v294 = vunpack.c.l.b16 %v282
  %v295 = vpack.c.b16 %v292, %v291
  %v296 = vpack.c.b16 %v294, %v293
  %v300 = vsel %vm117, %v271, 0
  %v303 = vsel %vm117, %v272, 0
  %v306 = vsel %vm117, %v273, 0
  %v309 = vsel %vm117, %v274, 0
  %v312 = vsel %vm117, %v275, 0
  %v315 = vsel %vm117, %v276, 0
  %v318 = vsel %vm117, %v277, 0
  %v321 = vsel %vm117, %v278, 0
  %323 = vmatpush.bf16.msra.mxu0 0
  %324 = vmatpush.bf16.msra.mxu0 0
  %325 = vmatpush.bf16.msra.mxu0 0
  %326 = vmatpush.bf16.msra.mxu0 0
  %327 = vmatpush.bf16.msra.mxu0 0
  %328 = vmatpush.bf16.msra.mxu0 0
  %329 = vmatpush.bf16.msra.mxu0 %v296
  %330 = vmatpush.bf16.msra.mxu0 %v295
  %331 = vmatmul.bf16.gmra.mxu0 %v300
  %v332 = vpop.f32.mrf.mxu0
  %v333 = vadd.f32 %v285, %v332
  %v334 = vpop.f32.mrf.mxu0
  %v335 = vadd.f32 %v285, %v334
  %336 = vmatmul.bf16.gmra.mxu0 %v303
  %v337 = vpop.f32.mrf.mxu0
  %v338 = vadd.f32 %v285, %v337
  %v339 = vpop.f32.mrf.mxu0
  %v340 = vadd.f32 %v285, %v339
  %341 = vmatmul.bf16.gmra.mxu0 %v306
  %v342 = vpop.f32.mrf.mxu0
  %v343 = vadd.f32 %v285, %v342
  %v344 = vpop.f32.mrf.mxu0
  %v345 = vadd.f32 %v285, %v344
  %346 = vmatmul.bf16.gmra.mxu0 %v309
  %v347 = vpop.f32.mrf.mxu0
  %v348 = vadd.f32 %v285, %v347
  %v349 = vpop.f32.mrf.mxu0
  %v350 = vadd.f32 %v285, %v349
  %351 = vmatmul.bf16.gmra.mxu0 %v312
  %v352 = vpop.f32.mrf.mxu0
  %v353 = vadd.f32 %v285, %v352
  %v354 = vpop.f32.mrf.mxu0
  %v355 = vadd.f32 %v285, %v354
  %356 = vmatmul.bf16.gmra.mxu0 %v315
  %v357 = vpop.f32.mrf.mxu0
  %v358 = vadd.f32 %v285, %v357
  %v359 = vpop.f32.mrf.mxu0
  %v360 = vadd.f32 %v285, %v359
  %361 = vmatmul.bf16.gmra.mxu0 %v318
  %v362 = vpop.f32.mrf.mxu0
  %v363 = vadd.f32 %v285, %v362
  %v364 = vpop.f32.mrf.mxu0
  %v365 = vadd.f32 %v285, %v364
  %366 = vmatmul.bf16.gmra.mxu0 %v321
  %v367 = vpop.f32.mrf.mxu0
  %v368 = vadd.f32 %v285, %v367
  %v369 = vpop.f32.mrf.mxu0
  %v370 = vadd.f32 %v285, %v369
  %371 = vdwg.mxu0
  %v372 = vld [vmem:[%s5] sm:$0xff]
  %v373 = vld [vmem:[%s5 + $0x8] sm:$0xff]
  %v374 = vld [vmem:[%s5 + $0x10] sm:$0xff]
  %v375 = vld [vmem:[%s5 + $0x18] sm:$0xff]
  %v376 = vld [vmem:[%s5 + $0x20] sm:$0xff]
  %v377 = vld [vmem:[%s5 + $0x28] sm:$0xff]
  %v378 = vld [vmem:[%s5 + $0x30] sm:$0xff]
  %v379 = vld [vmem:[%s5 + $0x38] sm:$0xff]
  %v380 = vld [vmem:[%s5 + $0x40] sm:$0xff]
  %v381 = vld [vmem:[%s5 + $0x48] sm:$0xff]
  %v382 = vld [vmem:[%s5 + $0x50] sm:$0xff]
  %v383 = vld [vmem:[%s5 + $0x58] sm:$0xff]
  %v384 = vld [vmem:[%s5 + $0x60] sm:$0xff]
  %v385 = vld [vmem:[%s5 + $0x68] sm:$0xff]
  %v386 = vld [vmem:[%s5 + $0x70] sm:$0xff]
  %v387 = vld [vmem:[%s5 + $0x78] sm:$0xff]
  %v388 = vld [vmem:[%s6] sm:$0xff]
  %v389 = vld [vmem:[%s6 + $0x8] sm:$0xff]
  %v390 = vld [vmem:[%s6 + $0x10] sm:$0xff]
  %v391 = vld [vmem:[%s6 + $0x18] sm:$0xff]
  %v392 = vld [vmem:[%s6 + $0x20] sm:$0xff]
  %v393 = vld [vmem:[%s6 + $0x28] sm:$0xff]
  %v394 = vld [vmem:[%s6 + $0x30] sm:$0xff]
  %v395 = vld [vmem:[%s6 + $0x38] sm:$0xff]
  %v396 = vld [vmem:[%s6 + $0x40] sm:$0xff]
  %v397 = vld [vmem:[%s6 + $0x48] sm:$0xff]
  %v398 = vld [vmem:[%s6 + $0x50] sm:$0xff]
  %v399 = vld [vmem:[%s6 + $0x58] sm:$0xff]
  %v400 = vld [vmem:[%s6 + $0x60] sm:$0xff]
  %v401 = vld [vmem:[%s6 + $0x68] sm:$0xff]
  %v402 = vld [vmem:[%s6 + $0x70] sm:$0xff]
  %v403 = vld [vmem:[%s6 + $0x78] sm:$0xff]
  %v404 = vld [vmem:[%s7] sm:$0xff]
  %v405 = vld [vmem:[%s7 + $0x8] sm:$0xff]
  %v406 = vld [vmem:[%s7 + $0x10] sm:$0xff]
  %v407 = vld [vmem:[%s7 + $0x18] sm:$0xff]
  %v408 = vld [vmem:[%s7 + $0x20] sm:$0xff]
  %v409 = vld [vmem:[%s7 + $0x28] sm:$0xff]
  %v410 = vld [vmem:[%s7 + $0x30] sm:$0xff]
  %v411 = vld [vmem:[%s7 + $0x38] sm:$0xff]
  %v412 = vld [vmem:[%s7 + $0x40] sm:$0xff]
  %v413 = vld [vmem:[%s7 + $0x48] sm:$0xff]
  %v414 = vld [vmem:[%s7 + $0x50] sm:$0xff]
  %v415 = vld [vmem:[%s7 + $0x58] sm:$0xff]
  %v416 = vld [vmem:[%s7 + $0x60] sm:$0xff]
  %v417 = vld [vmem:[%s7 + $0x68] sm:$0xff]
  %v418 = vld [vmem:[%s7 + $0x70] sm:$0xff]
  %v419 = vld [vmem:[%s7 + $0x78] sm:$0xff]
  %v420 = vld [vmem:[%s9] sm:$0x1]
  %437 = vrot.lane.b32.xlu0 %v404, 1
  %v438 = vpop.permute.xlu0 %437
  %439 = vrot.lane.b32.xlu0 %v405, 1
  %v440 = vpop.permute.xlu0 %439
  %441 = vrot.lane.b32.xlu0 %v406, 1
  %v442 = vpop.permute.xlu0 %441
  %443 = vrot.lane.b32.xlu0 %v407, 1
  %v444 = vpop.permute.xlu0 %443
  %445 = vrot.lane.b32.xlu0 %v408, 1
  %v446 = vpop.permute.xlu0 %445
  %447 = vrot.lane.b32.xlu0 %v409, 1
  %v448 = vpop.permute.xlu0 %447
  %449 = vrot.lane.b32.xlu0 %v410, 1
  %v450 = vpop.permute.xlu0 %449
  %451 = vrot.lane.b32.xlu0 %v411, 1
  %v452 = vpop.permute.xlu0 %451
  %453 = vrot.lane.b32.xlu0 %v412, 1
  %v454 = vpop.permute.xlu0 %453
  %455 = vrot.lane.b32.xlu0 %v413, 1
  %v456 = vpop.permute.xlu0 %455
  %457 = vrot.lane.b32.xlu0 %v414, 1
  %v458 = vpop.permute.xlu0 %457
  %459 = vrot.lane.b32.xlu0 %v415, 1
  %v460 = vpop.permute.xlu0 %459
  %461 = vrot.lane.b32.xlu0 %v416, 1
  %v462 = vpop.permute.xlu0 %461
  %463 = vrot.lane.b32.xlu0 %v417, 1
  %v464 = vpop.permute.xlu0 %463
  %465 = vrot.lane.b32.xlu0 %v418, 1
  %v466 = vpop.permute.xlu0 %465
  %467 = vrot.lane.b32.xlu0 %v419, 1
  %v468 = vpop.permute.xlu0 %467
  %v485 = vmul.f32 %v404, %v438
  %v486 = vmul.f32 %v405, %v440
  %v487 = vmul.f32 %v406, %v442
  %v488 = vmul.f32 %v407, %v444
  %v489 = vmul.f32 %v408, %v446
  %v490 = vmul.f32 %v409, %v448
  %v491 = vmul.f32 %v410, %v450
  %v492 = vmul.f32 %v411, %v452
  %v493 = vmul.f32 %v412, %v454
  %v494 = vmul.f32 %v413, %v456
  %v495 = vmul.f32 %v414, %v458
  %v496 = vmul.f32 %v415, %v460
  %v497 = vmul.f32 %v416, %v462
  %v498 = vmul.f32 %v417, %v464
  %v499 = vmul.f32 %v418, %v466
  %v500 = vmul.f32 %v419, %v468
  %vm501 = vcmask 130048
  %v502 = vsel %vm501, %v333, -inf
  %503 = vmax.xlane.f32.xlu0 %v502
  %v504 = vpop.xlane.xlu0 %503
  %v505 = vsel %vm501, %v335, -inf
  %506 = vmax.xlane.f32.xlu0 %v505
  %v507 = vpop.xlane.xlu0 %506
  %v508 = vsel %vm501, %v338, -inf
  %509 = vmax.xlane.f32.xlu0 %v508
  %v510 = vpop.xlane.xlu0 %509
  %v511 = vsel %vm501, %v340, -inf
  %512 = vmax.xlane.f32.xlu0 %v511
  %v513 = vpop.xlane.xlu0 %512
  %v514 = vsel %vm501, %v343, -inf
  %515 = vmax.xlane.f32.xlu0 %v514
  %v516 = vpop.xlane.xlu0 %515
  %v517 = vsel %vm501, %v345, -inf
  %518 = vmax.xlane.f32.xlu0 %v517
  %v519 = vpop.xlane.xlu0 %518
  %v520 = vsel %vm501, %v348, -inf
  %521 = vmax.xlane.f32.xlu0 %v520
  %v522 = vpop.xlane.xlu0 %521
  %v523 = vsel %vm501, %v350, -inf
  %524 = vmax.xlane.f32.xlu0 %v523
  %v525 = vpop.xlane.xlu0 %524
  %v526 = vsel %vm501, %v353, -inf
  %527 = vmax.xlane.f32.xlu0 %v526
  %v528 = vpop.xlane.xlu0 %527
  %v529 = vsel %vm501, %v355, -inf
  %530 = vmax.xlane.f32.xlu0 %v529
  %v531 = vpop.xlane.xlu0 %530
  %v532 = vsel %vm501, %v358, -inf
  %533 = vmax.xlane.f32.xlu0 %v532
  %v534 = vpop.xlane.xlu0 %533
  %v535 = vsel %vm501, %v360, -inf
  %536 = vmax.xlane.f32.xlu0 %v535
  %v537 = vpop.xlane.xlu0 %536
  %v538 = vsel %vm501, %v363, -inf
  %539 = vmax.xlane.f32.xlu0 %v538
  %v540 = vpop.xlane.xlu0 %539
  %v541 = vsel %vm501, %v365, -inf
  %542 = vmax.xlane.f32.xlu0 %v541
  %v543 = vpop.xlane.xlu0 %542
  %v544 = vsel %vm501, %v368, -inf
  %545 = vmax.xlane.f32.xlu0 %v544
  %v546 = vpop.xlane.xlu0 %545
  %v547 = vsel %vm501, %v370, -inf
  %548 = vmax.xlane.f32.xlu0 %v547
  %v549 = vpop.xlane.xlu0 %548
  %vm550 = vcmask 261248
  %v551 = vsel %vm550, %v333, -inf
  %552 = vmax.xlane.f32.xlu0 %v551
  %v553 = vpop.xlane.xlu0 %552
  %v554 = vsel %vm550, %v335, -inf
  %555 = vmax.xlane.f32.xlu0 %v554
  %v556 = vpop.xlane.xlu0 %555
  %v557 = vsel %vm550, %v338, -inf
  %558 = vmax.xlane.f32.xlu0 %v557
  %v559 = vpop.xlane.xlu0 %558
  %v560 = vsel %vm550, %v340, -inf
  %561 = vmax.xlane.f32.xlu0 %v560
  %v562 = vpop.xlane.xlu0 %561
  %v563 = vsel %vm550, %v343, -inf
  %564 = vmax.xlane.f32.xlu0 %v563
  %v565 = vpop.xlane.xlu0 %564
  %v566 = vsel %vm550, %v345, -inf
  %567 = vmax.xlane.f32.xlu0 %v566
  %v568 = vpop.xlane.xlu0 %567
  %v569 = vsel %vm550, %v348, -inf
  %570 = vmax.xlane.f32.xlu0 %v569
  %v571 = vpop.xlane.xlu0 %570
  %v572 = vsel %vm550, %v350, -inf
  %573 = vmax.xlane.f32.xlu0 %v572
  %v574 = vpop.xlane.xlu0 %573
  %v575 = vsel %vm550, %v353, -inf
  %576 = vmax.xlane.f32.xlu0 %v575
  %v577 = vpop.xlane.xlu0 %576
  %v578 = vsel %vm550, %v355, -inf
  %579 = vmax.xlane.f32.xlu0 %v578
  %v580 = vpop.xlane.xlu0 %579
  %v581 = vsel %vm550, %v358, -inf
  %582 = vmax.xlane.f32.xlu0 %v581
  %v583 = vpop.xlane.xlu0 %582
  %v584 = vsel %vm550, %v360, -inf
  %585 = vmax.xlane.f32.xlu0 %v584
  %v586 = vpop.xlane.xlu0 %585
  %v587 = vsel %vm550, %v363, -inf
  %588 = vmax.xlane.f32.xlu0 %v587
  %v589 = vpop.xlane.xlu0 %588
  %v590 = vsel %vm550, %v365, -inf
  %591 = vmax.xlane.f32.xlu0 %v590
  %v592 = vpop.xlane.xlu0 %591
  %v593 = vsel %vm550, %v368, -inf
  %594 = vmax.xlane.f32.xlu0 %v593
  %v595 = vpop.xlane.xlu0 %594
  %v596 = vsel %vm550, %v370, -inf
  %597 = vmax.xlane.f32.xlu0 %v596
  %v598 = vpop.xlane.xlu0 %597
  %vm599 = vcmask 392448
  %v600 = vsel %vm599, %v333, -inf
  %601 = vmax.xlane.f32.xlu0 %v600
  %v602 = vpop.xlane.xlu0 %601
  %v603 = vsel %vm599, %v335, -inf
  %604 = vmax.xlane.f32.xlu0 %v603
  %v605 = vpop.xlane.xlu0 %604
  %v606 = vsel %vm599, %v338, -inf
  %607 = vmax.xlane.f32.xlu0 %v606
  %v608 = vpop.xlane.xlu0 %607
  %v609 = vsel %vm599, %v340, -inf
  %610 = vmax.xlane.f32.xlu0 %v609
  %v611 = vpop.xlane.xlu0 %610
  %v612 = vsel %vm599, %v343, -inf
  %613 = vmax.xlane.f32.xlu0 %v612
  %v614 = vpop.xlane.xlu0 %613
  %v615 = vsel %vm599, %v345, -inf
  %616 = vmax.xlane.f32.xlu0 %v615
  %v617 = vpop.xlane.xlu0 %616
  %v618 = vsel %vm599, %v348, -inf
  %619 = vmax.xlane.f32.xlu0 %v618
  %v620 = vpop.xlane.xlu0 %619
  %v621 = vsel %vm599, %v350, -inf
  %622 = vmax.xlane.f32.xlu0 %v621
  %v623 = vpop.xlane.xlu0 %622
  %v624 = vsel %vm599, %v353, -inf
  %625 = vmax.xlane.f32.xlu0 %v624
  %v626 = vpop.xlane.xlu0 %625
  %v627 = vsel %vm599, %v355, -inf
  %628 = vmax.xlane.f32.xlu0 %v627
  %v629 = vpop.xlane.xlu0 %628
  %v630 = vsel %vm599, %v358, -inf
  %631 = vmax.xlane.f32.xlu0 %v630
  %v632 = vpop.xlane.xlu0 %631
  %v633 = vsel %vm599, %v360, -inf
  %634 = vmax.xlane.f32.xlu0 %v633
  %v635 = vpop.xlane.xlu0 %634
  %v636 = vsel %vm599, %v363, -inf
  %637 = vmax.xlane.f32.xlu0 %v636
  %v638 = vpop.xlane.xlu0 %637
  %v639 = vsel %vm599, %v365, -inf
  %640 = vmax.xlane.f32.xlu0 %v639
  %v641 = vpop.xlane.xlu0 %640
  %v642 = vsel %vm599, %v368, -inf
  %643 = vmax.xlane.f32.xlu0 %v642
  %v644 = vpop.xlane.xlu0 %643
  %v645 = vsel %vm599, %v370, -inf
  %646 = vmax.xlane.f32.xlu0 %v645
  %v647 = vpop.xlane.xlu0 %646
  %vm648 = vcmask 523648
  %v649 = vsel %vm648, %v333, -inf
  %650 = vmax.xlane.f32.xlu0 %v649
  %v651 = vpop.xlane.xlu0 %650
  %v652 = vsel %vm648, %v335, -inf
  %653 = vmax.xlane.f32.xlu0 %v652
  %v654 = vpop.xlane.xlu0 %653
  %v655 = vsel %vm648, %v338, -inf
  %656 = vmax.xlane.f32.xlu0 %v655
  %v657 = vpop.xlane.xlu0 %656
  %v658 = vsel %vm648, %v340, -inf
  %659 = vmax.xlane.f32.xlu0 %v658
  %v660 = vpop.xlane.xlu0 %659
  %v661 = vsel %vm648, %v343, -inf
  %662 = vmax.xlane.f32.xlu0 %v661
  %v663 = vpop.xlane.xlu0 %662
  %v664 = vsel %vm648, %v345, -inf
  %665 = vmax.xlane.f32.xlu0 %v664
  %v666 = vpop.xlane.xlu0 %665
  %v667 = vsel %vm648, %v348, -inf
  %668 = vmax.xlane.f32.xlu0 %v667
  %v669 = vpop.xlane.xlu0 %668
  %v670 = vsel %vm648, %v350, -inf
  %671 = vmax.xlane.f32.xlu0 %v670
  %v672 = vpop.xlane.xlu0 %671
  %v673 = vsel %vm648, %v353, -inf
  %674 = vmax.xlane.f32.xlu0 %v673
  %v675 = vpop.xlane.xlu0 %674
  %v676 = vsel %vm648, %v355, -inf
  %677 = vmax.xlane.f32.xlu0 %v676
  %v678 = vpop.xlane.xlu0 %677
  %v679 = vsel %vm648, %v358, -inf
  %680 = vmax.xlane.f32.xlu0 %v679
  %v681 = vpop.xlane.xlu0 %680
  %v682 = vsel %vm648, %v360, -inf
  %683 = vmax.xlane.f32.xlu0 %v682
  %v684 = vpop.xlane.xlu0 %683
  %v685 = vsel %vm648, %v363, -inf
  %686 = vmax.xlane.f32.xlu0 %v685
  %v687 = vpop.xlane.xlu0 %686
  %v688 = vsel %vm648, %v365, -inf
  %689 = vmax.xlane.f32.xlu0 %v688
  %v690 = vpop.xlane.xlu0 %689
  %v691 = vsel %vm648, %v368, -inf
  %692 = vmax.xlane.f32.xlu0 %v691
  %v693 = vpop.xlane.xlu0 %692
  %v694 = vsel %vm648, %v370, -inf
  %695 = vmax.xlane.f32.xlu0 %v694
  %v696 = vpop.xlane.xlu0 %695
  %v697 = vsel %vm501, %v504, %v553
  %v698 = vsel %vm501, %v507, %v556
  %v699 = vsel %vm501, %v510, %v559
  %v700 = vsel %vm501, %v513, %v562
  %v701 = vsel %vm501, %v516, %v565
  %v702 = vsel %vm501, %v519, %v568
  %v703 = vsel %vm501, %v522, %v571
  %v704 = vsel %vm501, %v525, %v574
  %v705 = vsel %vm501, %v528, %v577
  %v706 = vsel %vm501, %v531, %v580
  %v707 = vsel %vm501, %v534, %v583
  %v708 = vsel %vm501, %v537, %v586
  %v709 = vsel %vm501, %v540, %v589
  %v710 = vsel %vm501, %v543, %v592
  %v711 = vsel %vm501, %v546, %v595
  %v712 = vsel %vm501, %v549, %v598
  %v713 = vsel %vm117, %v697, %v602
  %v714 = vsel %vm117, %v698, %v605
  %v715 = vsel %vm117, %v699, %v608
  %v716 = vsel %vm117, %v700, %v611
  %v717 = vsel %vm117, %v701, %v614
  %v718 = vsel %vm117, %v702, %v617
  %v719 = vsel %vm117, %v703, %v620
  %v720 = vsel %vm117, %v704, %v623
  %v721 = vsel %vm117, %v705, %v626
  %v722 = vsel %vm117, %v706, %v629
  %v723 = vsel %vm117, %v707, %v632
  %v724 = vsel %vm117, %v708, %v635
  %v725 = vsel %vm117, %v709, %v638
  %v726 = vsel %vm117, %v710, %v641
  %v727 = vsel %vm117, %v711, %v644
  %v728 = vsel %vm117, %v712, %v647
  %vm729 = vcmask 392192
  %v730 = vsel %vm729, %v713, %v651
  %v731 = vsel %vm729, %v714, %v654
  %v732 = vsel %vm729, %v715, %v657
  %v733 = vsel %vm729, %v716, %v660
  %v734 = vsel %vm729, %v717, %v663
  %v735 = vsel %vm729, %v718, %v666
  %v736 = vsel %vm729, %v719, %v669
  %v737 = vsel %vm729, %v720, %v672
  %v738 = vsel %vm729, %v721, %v675
  %v739 = vsel %vm729, %v722, %v678
  %v740 = vsel %vm729, %v723, %v681
  %v741 = vsel %vm729, %v724, %v684
  %v742 = vsel %vm729, %v725, %v687
  %v743 = vsel %vm729, %v726, %v690
  %v744 = vsel %vm729, %v727, %v693
  %v745 = vsel %vm729, %v728, %v696
  %v746 = vsub.f32 %v333, %v730
  %v747 = vsub.f32 %v335, %v731
  %v748 = vsub.f32 %v338, %v732
  %v749 = vsub.f32 %v340, %v733
  %v750 = vsub.f32 %v343, %v734
  %v751 = vsub.f32 %v345, %v735
  %v752 = vsub.f32 %v348, %v736
  %v753 = vsub.f32 %v350, %v737
  %v754 = vsub.f32 %v353, %v738
  %v755 = vsub.f32 %v355, %v739
  %v756 = vsub.f32 %v358, %v740
  %v757 = vsub.f32 %v360, %v741
  %v758 = vsub.f32 %v363, %v742
  %v759 = vsub.f32 %v365, %v743
  %v760 = vsub.f32 %v368, %v744
  %v761 = vsub.f32 %v370, %v745
  %v762 = vmul.f32 %v746, 1.442695
  %v763 = vpow.pop %v762
  %v764 = vmul.f32 %v747, 1.442695
  %v765 = vpow.pop %v764
  %v766 = vmul.f32 %v748, 1.442695
  %v767 = vpow.pop %v766
  %v768 = vmul.f32 %v749, 1.442695
  %v769 = vpow.pop %v768
  %v770 = vmul.f32 %v750, 1.442695
  %v771 = vpow.pop %v770
  %v772 = vmul.f32 %v751, 1.442695
  %v773 = vpow.pop %v772
  %v774 = vmul.f32 %v752, 1.442695
  %v775 = vpow.pop %v774
  %v776 = vmul.f32 %v753, 1.442695
  %v777 = vpow.pop %v776
  %v778 = vmul.f32 %v754, 1.442695
  %v779 = vpow.pop %v778
  %v780 = vmul.f32 %v755, 1.442695
  %v781 = vpow.pop %v780
  %v782 = vmul.f32 %v756, 1.442695
  %v783 = vpow.pop %v782
  %v784 = vmul.f32 %v757, 1.442695
  %v785 = vpow.pop %v784
  %v786 = vmul.f32 %v758, 1.442695
  %v787 = vpow.pop %v786
  %v788 = vmul.f32 %v759, 1.442695
  %v789 = vpow.pop %v788
  %v790 = vmul.f32 %v760, 1.442695
  %v791 = vpow.pop %v790
  %v792 = vmul.f32 %v761, 1.442695
  %v793 = vpow.pop %v792
  %v795 = vperm.slane %v420, 0
  %v797 = vmul.f32 %v763, %v795
  %v798 = vmul.f32 %v765, %v795
  %v799 = vmul.f32 %v767, %v795
  %v800 = vmul.f32 %v769, %v795
  %v801 = vmul.f32 %v771, %v795
  %v802 = vmul.f32 %v773, %v795
  %v803 = vmul.f32 %v775, %v795
  %v804 = vmul.f32 %v777, %v795
  %v805 = vmul.f32 %v779, %v795
  %v806 = vmul.f32 %v781, %v795
  %v807 = vmul.f32 %v783, %v795
  %v808 = vmul.f32 %v785, %v795
  %v809 = vmul.f32 %v787, %v795
  %v810 = vmul.f32 %v789, %v795
  %v811 = vmul.f32 %v791, %v795
  %v812 = vmul.f32 %v793, %v795
  %829 = vrot.lane.b32.xlu0 %v797, 64
  %v830 = vpop.permute.xlu0 %829
  %831 = vrot.lane.b32.xlu0 %v798, 64
  %v832 = vpop.permute.xlu0 %831
  %833 = vrot.lane.b32.xlu0 %v799, 64
  %v834 = vpop.permute.xlu0 %833
  %835 = vrot.lane.b32.xlu0 %v800, 64
  %v836 = vpop.permute.xlu0 %835
  %837 = vrot.lane.b32.xlu0 %v801, 64
  %v838 = vpop.permute.xlu0 %837
  %839 = vrot.lane.b32.xlu0 %v802, 64
  %v840 = vpop.permute.xlu0 %839
  %841 = vrot.lane.b32.xlu0 %v803, 64
  %v842 = vpop.permute.xlu0 %841
  %843 = vrot.lane.b32.xlu0 %v804, 64
  %v844 = vpop.permute.xlu0 %843
  %845 = vrot.lane.b32.xlu0 %v805, 64
  %v846 = vpop.permute.xlu0 %845
  %847 = vrot.lane.b32.xlu0 %v806, 64
  %v848 = vpop.permute.xlu0 %847
  %849 = vrot.lane.b32.xlu0 %v807, 64
  %v850 = vpop.permute.xlu0 %849
  %851 = vrot.lane.b32.xlu0 %v808, 64
  %v852 = vpop.permute.xlu0 %851
  %853 = vrot.lane.b32.xlu0 %v809, 64
  %v854 = vpop.permute.xlu0 %853
  %855 = vrot.lane.b32.xlu0 %v810, 64
  %v856 = vpop.permute.xlu0 %855
  %857 = vrot.lane.b32.xlu0 %v811, 64
  %v858 = vpop.permute.xlu0 %857
  %859 = vrot.lane.b32.xlu0 %v812, 64
  %v860 = vpop.permute.xlu0 %859
  %vm877 = vcmask 523264
  %v878 = vsel %vm877, %v763, %v830
  %v879 = vsel %vm877, %v765, %v832
  %v880 = vsel %vm877, %v767, %v834
  %v881 = vsel %vm877, %v769, %v836
  %v882 = vsel %vm877, %v771, %v838
  %v883 = vsel %vm877, %v773, %v840
  %v884 = vsel %vm877, %v775, %v842
  %v885 = vsel %vm877, %v777, %v844
  %v886 = vsel %vm877, %v779, %v846
  %v887 = vsel %vm877, %v781, %v848
  %v888 = vsel %vm877, %v783, %v850
  %v889 = vsel %vm877, %v785, %v852
  %v890 = vsel %vm877, %v787, %v854
  %v891 = vsel %vm877, %v789, %v856
  %v892 = vsel %vm877, %v791, %v858
  %v893 = vsel %vm877, %v793, %v860
  %v894 = vld [vmem:[%s8] sm:$0xff]
  %v895 = vld [vmem:[%s8 + $0x8] sm:$0xff]
  %v896 = vld [vmem:[%s8 + $0x10] sm:$0xff]
  %v897 = vld [vmem:[%s8 + $0x18] sm:$0xff]
  %v898 = vld [vmem:[%s8 + $0x20] sm:$0xff]
  %v899 = vld [vmem:[%s8 + $0x28] sm:$0xff]
  %v900 = vld [vmem:[%s8 + $0x30] sm:$0xff]
  %v901 = vld [vmem:[%s8 + $0x38] sm:$0xff]
  %v902 = vld [vmem:[%s8 + $0x40] sm:$0xff]
  %v903 = vld [vmem:[%s8 + $0x48] sm:$0xff]
  %v904 = vld [vmem:[%s8 + $0x50] sm:$0xff]
  %v905 = vld [vmem:[%s8 + $0x58] sm:$0xff]
  %v906 = vld [vmem:[%s8 + $0x60] sm:$0xff]
  %v907 = vld [vmem:[%s8 + $0x68] sm:$0xff]
  %v908 = vld [vmem:[%s8 + $0x70] sm:$0xff]
  %v909 = vld [vmem:[%s8 + $0x78] sm:$0xff]
  %910 = vmatpush.msra.mxu0 %v909
  %911 = vmatpush.msra.mxu0 %v908
  %912 = vmatpush.msra.mxu0 %v907
  %913 = vmatpush.msra.mxu0 %v906
  %914 = vmatpush.msra.mxu0 %v905
  %915 = vmatpush.msra.mxu0 %v904
  %916 = vmatpush.msra.mxu0 %v903
  %917 = vmatpush.msra.mxu0 %v902
  %918 = vmatpush.msra.mxu0 %v901
  %919 = vmatpush.msra.mxu0 %v900
  %920 = vmatpush.msra.mxu0 %v899
  %921 = vmatpush.msra.mxu0 %v898
  %922 = vmatpush.msra.mxu0 %v897
  %923 = vmatpush.msra.mxu0 %v896
  %924 = vmatpush.msra.mxu0 %v895
  %925 = vmatpush.msra.mxu0 %v894
  %926 = vmatmul.f32.gmra.mxu0 %v878
  %v927 = vpop.f32.mrf.mxu0
  %v928 = vadd.f32 0.0, %v927
  %929 = vmatmul.f32.gmra.mxu0 %v879
  %v930 = vpop.f32.mrf.mxu0
  %v931 = vadd.f32 0.0, %v930
  %932 = vmatmul.f32.gmra.mxu0 %v880
  %v933 = vpop.f32.mrf.mxu0
  %v934 = vadd.f32 0.0, %v933
  %935 = vmatmul.f32.gmra.mxu0 %v881
  %v936 = vpop.f32.mrf.mxu0
  %v937 = vadd.f32 0.0, %v936
  %938 = vmatmul.f32.gmra.mxu0 %v882
  %v939 = vpop.f32.mrf.mxu0
  %v940 = vadd.f32 0.0, %v939
  %941 = vmatmul.f32.gmra.mxu0 %v883
  %v942 = vpop.f32.mrf.mxu0
  %v943 = vadd.f32 0.0, %v942
  %944 = vmatmul.f32.gmra.mxu0 %v884
  %v945 = vpop.f32.mrf.mxu0
  %v946 = vadd.f32 0.0, %v945
  %947 = vmatmul.f32.gmra.mxu0 %v885
  %v948 = vpop.f32.mrf.mxu0
  %v949 = vadd.f32 0.0, %v948
  %950 = vmatmul.f32.gmra.mxu0 %v886
  %v951 = vpop.f32.mrf.mxu0
  %v952 = vadd.f32 0.0, %v951
  %953 = vmatmul.f32.gmra.mxu0 %v887
  %v954 = vpop.f32.mrf.mxu0
  %v955 = vadd.f32 0.0, %v954
  %956 = vmatmul.f32.gmra.mxu0 %v888
  %v957 = vpop.f32.mrf.mxu0
  %v958 = vadd.f32 0.0, %v957
  %959 = vmatmul.f32.gmra.mxu0 %v889
  %v960 = vpop.f32.mrf.mxu0
  %v961 = vadd.f32 0.0, %v960
  %962 = vmatmul.f32.gmra.mxu0 %v890
  %v963 = vpop.f32.mrf.mxu0
  %v964 = vadd.f32 0.0, %v963
  %965 = vmatmul.f32.gmra.mxu0 %v891
  %v966 = vpop.f32.mrf.mxu0
  %v967 = vadd.f32 0.0, %v966
  %968 = vmatmul.f32.gmra.mxu0 %v892
  %v969 = vpop.f32.mrf.mxu0
  %v970 = vadd.f32 0.0, %v969
  %971 = vmatmul.f32.gmra.mxu0 %v893
  %v972 = vpop.f32.mrf.mxu0
  %v973 = vadd.f32 0.0, %v972
  %974 = vdwg.mxu0
  %991 = vrot.lane.b32.xlu0 %v928, 124
  %v992 = vpop.permute.xlu0 %991
  %993 = vrot.lane.b32.xlu0 %v931, 124
  %v994 = vpop.permute.xlu0 %993
  %995 = vrot.lane.b32.xlu0 %v934, 124
  %v996 = vpop.permute.xlu0 %995
  %997 = vrot.lane.b32.xlu0 %v937, 124
  %v998 = vpop.permute.xlu0 %997
  %999 = vrot.lane.b32.xlu0 %v940, 124
  %v1000 = vpop.permute.xlu0 %999
  %1001 = vrot.lane.b32.xlu0 %v943, 124
  %v1002 = vpop.permute.xlu0 %1001
  %1003 = vrot.lane.b32.xlu0 %v946, 124
  %v1004 = vpop.permute.xlu0 %1003
  %1005 = vrot.lane.b32.xlu0 %v949, 124
  %v1006 = vpop.permute.xlu0 %1005
  %1007 = vrot.lane.b32.xlu0 %v952, 124
  %v1008 = vpop.permute.xlu0 %1007
  %1009 = vrot.lane.b32.xlu0 %v955, 124
  %v1010 = vpop.permute.xlu0 %1009
  %1011 = vrot.lane.b32.xlu0 %v958, 124
  %v1012 = vpop.permute.xlu0 %1011
  %1013 = vrot.lane.b32.xlu0 %v961, 124
  %v1014 = vpop.permute.xlu0 %1013
  %1015 = vrot.lane.b32.xlu0 %v964, 124
  %v1016 = vpop.permute.xlu0 %1015
  %1017 = vrot.lane.b32.xlu0 %v967, 124
  %v1018 = vpop.permute.xlu0 %1017
  %1019 = vrot.lane.b32.xlu0 %v970, 124
  %v1020 = vpop.permute.xlu0 %1019
  %1021 = vrot.lane.b32.xlu0 %v973, 124
  %v1022 = vpop.permute.xlu0 %1021
  %v1039 = vrcp.pop %v992
  %v1040 = vmul.f32 %v992, %v1039
  %v1041 = vsub.f32 1.0, %v1040
  %v1042 = vmul.f32 %v1039, %v1041
  %v1043 = vadd.f32 %v1039, %v1042
  %vm1044 = vweird.f32 %v992
  %vm1045 = vweird.f32 %v1039
  %vm1046 = vmor %vm1044, %vm1045
  %v1047 = vsel %vm1046, %v1039, %v1043
  %v1048 = vand.u32 2147483647, %v992
  %vm1049 = vcmp.eq.f32.partialorder %v1048, 8.507059e+37
  %v1050 = vand.u32 %v992, 2147483648
  %v1051 = vor.u32 1.1754944e-38, %v1050
  %v1052 = vsel %vm1049, %v1051, %v1047
  %v1053 = vmul.f32 %v928, %v1052
  %v1054 = vrcp.pop %v994
  %v1055 = vmul.f32 %v994, %v1054
  %v1056 = vsub.f32 1.0, %v1055
  %v1057 = vmul.f32 %v1054, %v1056
  %v1058 = vadd.f32 %v1054, %v1057
  %vm1059 = vweird.f32 %v994
  %vm1060 = vweird.f32 %v1054
  %vm1061 = vmor %vm1059, %vm1060
  %v1062 = vsel %vm1061, %v1054, %v1058
  %v1063 = vand.u32 2147483647, %v994
  %vm1064 = vcmp.eq.f32.partialorder %v1063, 8.507059e+37
  %v1065 = vand.u32 %v994, 2147483648
  %v1066 = vor.u32 1.1754944e-38, %v1065
  %v1067 = vsel %vm1064, %v1066, %v1062
  %v1068 = vmul.f32 %v931, %v1067
  %v1069 = vrcp.pop %v996
  %v1070 = vmul.f32 %v996, %v1069
  %v1071 = vsub.f32 1.0, %v1070
  %v1072 = vmul.f32 %v1069, %v1071
  %v1073 = vadd.f32 %v1069, %v1072
  %vm1074 = vweird.f32 %v996
  %vm1075 = vweird.f32 %v1069
  %vm1076 = vmor %vm1074, %vm1075
  %v1077 = vsel %vm1076, %v1069, %v1073
  %v1078 = vand.u32 2147483647, %v996
  %vm1079 = vcmp.eq.f32.partialorder %v1078, 8.507059e+37
  %v1080 = vand.u32 %v996, 2147483648
  %v1081 = vor.u32 1.1754944e-38, %v1080
  %v1082 = vsel %vm1079, %v1081, %v1077
  %v1083 = vmul.f32 %v934, %v1082
  %v1084 = vrcp.pop %v998
  %v1085 = vmul.f32 %v998, %v1084
  %v1086 = vsub.f32 1.0, %v1085
  %v1087 = vmul.f32 %v1084, %v1086
  %v1088 = vadd.f32 %v1084, %v1087
  %vm1089 = vweird.f32 %v998
  %vm1090 = vweird.f32 %v1084
  %vm1091 = vmor %vm1089, %vm1090
  %v1092 = vsel %vm1091, %v1084, %v1088
  %v1093 = vand.u32 2147483647, %v998
  %vm1094 = vcmp.eq.f32.partialorder %v1093, 8.507059e+37
  %v1095 = vand.u32 %v998, 2147483648
  %v1096 = vor.u32 1.1754944e-38, %v1095
  %v1097 = vsel %vm1094, %v1096, %v1092
  %v1098 = vmul.f32 %v937, %v1097
  %v1099 = vrcp.pop %v1000
  %v1100 = vmul.f32 %v1000, %v1099
  %v1101 = vsub.f32 1.0, %v1100
  %v1102 = vmul.f32 %v1099, %v1101
  %v1103 = vadd.f32 %v1099, %v1102
  %vm1104 = vweird.f32 %v1000
  %vm1105 = vweird.f32 %v1099
  %vm1106 = vmor %vm1104, %vm1105
  %v1107 = vsel %vm1106, %v1099, %v1103
  %v1108 = vand.u32 2147483647, %v1000
  %vm1109 = vcmp.eq.f32.partialorder %v1108, 8.507059e+37
  %v1110 = vand.u32 %v1000, 2147483648
  %v1111 = vor.u32 1.1754944e-38, %v1110
  %v1112 = vsel %vm1109, %v1111, %v1107
  %v1113 = vmul.f32 %v940, %v1112
  %v1114 = vrcp.pop %v1002
  %v1115 = vmul.f32 %v1002, %v1114
  %v1116 = vsub.f32 1.0, %v1115
  %v1117 = vmul.f32 %v1114, %v1116
  %v1118 = vadd.f32 %v1114, %v1117
  %vm1119 = vweird.f32 %v1002
  %vm1120 = vweird.f32 %v1114
  %vm1121 = vmor %vm1119, %vm1120
  %v1122 = vsel %vm1121, %v1114, %v1118
  %v1123 = vand.u32 2147483647, %v1002
  %vm1124 = vcmp.eq.f32.partialorder %v1123, 8.507059e+37
  %v1125 = vand.u32 %v1002, 2147483648
  %v1126 = vor.u32 1.1754944e-38, %v1125
  %v1127 = vsel %vm1124, %v1126, %v1122
  %v1128 = vmul.f32 %v943, %v1127
  %v1129 = vrcp.pop %v1004
  %v1130 = vmul.f32 %v1004, %v1129
  %v1131 = vsub.f32 1.0, %v1130
  %v1132 = vmul.f32 %v1129, %v1131
  %v1133 = vadd.f32 %v1129, %v1132
  %vm1134 = vweird.f32 %v1004
  %vm1135 = vweird.f32 %v1129
  %vm1136 = vmor %vm1134, %vm1135
  %v1137 = vsel %vm1136, %v1129, %v1133
  %v1138 = vand.u32 2147483647, %v1004
  %vm1139 = vcmp.eq.f32.partialorder %v1138, 8.507059e+37
  %v1140 = vand.u32 %v1004, 2147483648
  %v1141 = vor.u32 1.1754944e-38, %v1140
  %v1142 = vsel %vm1139, %v1141, %v1137
  %v1143 = vmul.f32 %v946, %v1142
  %v1144 = vrcp.pop %v1006
  %v1145 = vmul.f32 %v1006, %v1144
  %v1146 = vsub.f32 1.0, %v1145
  %v1147 = vmul.f32 %v1144, %v1146
  %v1148 = vadd.f32 %v1144, %v1147
  %vm1149 = vweird.f32 %v1006
  %vm1150 = vweird.f32 %v1144
  %vm1151 = vmor %vm1149, %vm1150
  %v1152 = vsel %vm1151, %v1144, %v1148
  %v1153 = vand.u32 2147483647, %v1006
  %vm1154 = vcmp.eq.f32.partialorder %v1153, 8.507059e+37
  %v1155 = vand.u32 %v1006, 2147483648
  %v1156 = vor.u32 1.1754944e-38, %v1155
  %v1157 = vsel %vm1154, %v1156, %v1152
  %v1158 = vmul.f32 %v949, %v1157
  %v1159 = vrcp.pop %v1008
  %v1160 = vmul.f32 %v1008, %v1159
  %v1161 = vsub.f32 1.0, %v1160
  %v1162 = vmul.f32 %v1159, %v1161
  %v1163 = vadd.f32 %v1159, %v1162
  %vm1164 = vweird.f32 %v1008
  %vm1165 = vweird.f32 %v1159
  %vm1166 = vmor %vm1164, %vm1165
  %v1167 = vsel %vm1166, %v1159, %v1163
  %v1168 = vand.u32 2147483647, %v1008
  %vm1169 = vcmp.eq.f32.partialorder %v1168, 8.507059e+37
  %v1170 = vand.u32 %v1008, 2147483648
  %v1171 = vor.u32 1.1754944e-38, %v1170
  %v1172 = vsel %vm1169, %v1171, %v1167
  %v1173 = vmul.f32 %v952, %v1172
  %v1174 = vrcp.pop %v1010
  %v1175 = vmul.f32 %v1010, %v1174
  %v1176 = vsub.f32 1.0, %v1175
  %v1177 = vmul.f32 %v1174, %v1176
  %v1178 = vadd.f32 %v1174, %v1177
  %vm1179 = vweird.f32 %v1010
  %vm1180 = vweird.f32 %v1174
  %vm1181 = vmor %vm1179, %vm1180
  %v1182 = vsel %vm1181, %v1174, %v1178
  %v1183 = vand.u32 2147483647, %v1010
  %vm1184 = vcmp.eq.f32.partialorder %v1183, 8.507059e+37
  %v1185 = vand.u32 %v1010, 2147483648
  %v1186 = vor.u32 1.1754944e-38, %v1185
  %v1187 = vsel %vm1184, %v1186, %v1182
  %v1188 = vmul.f32 %v955, %v1187
  %v1189 = vrcp.pop %v1012
  %v1190 = vmul.f32 %v1012, %v1189
  %v1191 = vsub.f32 1.0, %v1190
  %v1192 = vmul.f32 %v1189, %v1191
  %v1193 = vadd.f32 %v1189, %v1192
  %vm1194 = vweird.f32 %v1012
  %vm1195 = vweird.f32 %v1189
  %vm1196 = vmor %vm1194, %vm1195
  %v1197 = vsel %vm1196, %v1189, %v1193
  %v1198 = vand.u32 2147483647, %v1012
  %vm1199 = vcmp.eq.f32.partialorder %v1198, 8.507059e+37
  %v1200 = vand.u32 %v1012, 2147483648
  %v1201 = vor.u32 1.1754944e-38, %v1200
  %v1202 = vsel %vm1199, %v1201, %v1197
  %v1203 = vmul.f32 %v958, %v1202
  %v1204 = vrcp.pop %v1014
  %v1205 = vmul.f32 %v1014, %v1204
  %v1206 = vsub.f32 1.0, %v1205
  %v1207 = vmul.f32 %v1204, %v1206
  %v1208 = vadd.f32 %v1204, %v1207
  %vm1209 = vweird.f32 %v1014
  %vm1210 = vweird.f32 %v1204
  %vm1211 = vmor %vm1209, %vm1210
  %v1212 = vsel %vm1211, %v1204, %v1208
  %v1213 = vand.u32 2147483647, %v1014
  %vm1214 = vcmp.eq.f32.partialorder %v1213, 8.507059e+37
  %v1215 = vand.u32 %v1014, 2147483648
  %v1216 = vor.u32 1.1754944e-38, %v1215
  %v1217 = vsel %vm1214, %v1216, %v1212
  %v1218 = vmul.f32 %v961, %v1217
  %v1219 = vrcp.pop %v1016
  %v1220 = vmul.f32 %v1016, %v1219
  %v1221 = vsub.f32 1.0, %v1220
  %v1222 = vmul.f32 %v1219, %v1221
  %v1223 = vadd.f32 %v1219, %v1222
  %vm1224 = vweird.f32 %v1016
  %vm1225 = vweird.f32 %v1219
  %vm1226 = vmor %vm1224, %vm1225
  %v1227 = vsel %vm1226, %v1219, %v1223
  %v1228 = vand.u32 2147483647, %v1016
  %vm1229 = vcmp.eq.f32.partialorder %v1228, 8.507059e+37
  %v1230 = vand.u32 %v1016, 2147483648
  %v1231 = vor.u32 1.1754944e-38, %v1230
  %v1232 = vsel %vm1229, %v1231, %v1227
  %v1233 = vmul.f32 %v964, %v1232
  %v1234 = vrcp.pop %v1018
  %v1235 = vmul.f32 %v1018, %v1234
  %v1236 = vsub.f32 1.0, %v1235
  %v1237 = vmul.f32 %v1234, %v1236
  %v1238 = vadd.f32 %v1234, %v1237
  %vm1239 = vweird.f32 %v1018
  %vm1240 = vweird.f32 %v1234
  %vm1241 = vmor %vm1239, %vm1240
  %v1242 = vsel %vm1241, %v1234, %v1238
  %v1243 = vand.u32 2147483647, %v1018
  %vm1244 = vcmp.eq.f32.partialorder %v1243, 8.507059e+37
  %v1245 = vand.u32 %v1018, 2147483648
  %v1246 = vor.u32 1.1754944e-38, %v1245
  %v1247 = vsel %vm1244, %v1246, %v1242
  %v1248 = vmul.f32 %v967, %v1247
  %v1249 = vrcp.pop %v1020
  %v1250 = vmul.f32 %v1020, %v1249
  %v1251 = vsub.f32 1.0, %v1250
  %v1252 = vmul.f32 %v1249, %v1251
  %v1253 = vadd.f32 %v1249, %v1252
  %vm1254 = vweird.f32 %v1020
  %vm1255 = vweird.f32 %v1249
  %vm1256 = vmor %vm1254, %vm1255
  %v1257 = vsel %vm1256, %v1249, %v1253
  %v1258 = vand.u32 2147483647, %v1020
  %vm1259 = vcmp.eq.f32.partialorder %v1258, 8.507059e+37
  %v1260 = vand.u32 %v1020, 2147483648
  %v1261 = vor.u32 1.1754944e-38, %v1260
  %v1262 = vsel %vm1259, %v1261, %v1257
  %v1263 = vmul.f32 %v970, %v1262
  %v1264 = vrcp.pop %v1022
  %v1265 = vmul.f32 %v1022, %v1264
  %v1266 = vsub.f32 1.0, %v1265
  %v1267 = vmul.f32 %v1264, %v1266
  %v1268 = vadd.f32 %v1264, %v1267
  %vm1269 = vweird.f32 %v1022
  %vm1270 = vweird.f32 %v1264
  %vm1271 = vmor %vm1269, %vm1270
  %v1272 = vsel %vm1271, %v1264, %v1268
  %v1273 = vand.u32 2147483647, %v1022
  %vm1274 = vcmp.eq.f32.partialorder %v1273, 8.507059e+37
  %v1275 = vand.u32 %v1022, 2147483648
  %v1276 = vor.u32 1.1754944e-38, %v1275
  %v1277 = vsel %vm1274, %v1276, %v1272
  %v1278 = vmul.f32 %v973, %v1277
  %v1279 = vlog2.pop %v928
  %v1280 = vmul.f32 %v1279, 0.6931472
  %v1281 = vlog2.pop %v931
  %v1282 = vmul.f32 %v1281, 0.6931472
  %v1283 = vlog2.pop %v934
  %v1284 = vmul.f32 %v1283, 0.6931472
  %v1285 = vlog2.pop %v937
  %v1286 = vmul.f32 %v1285, 0.6931472
  %v1287 = vlog2.pop %v940
  %v1288 = vmul.f32 %v1287, 0.6931472
  %v1289 = vlog2.pop %v943
  %v1290 = vmul.f32 %v1289, 0.6931472
  %v1291 = vlog2.pop %v946
  %v1292 = vmul.f32 %v1291, 0.6931472
  %v1293 = vlog2.pop %v949
  %v1294 = vmul.f32 %v1293, 0.6931472
  %v1295 = vlog2.pop %v952
  %v1296 = vmul.f32 %v1295, 0.6931472
  %v1297 = vlog2.pop %v955
  %v1298 = vmul.f32 %v1297, 0.6931472
  %v1299 = vlog2.pop %v958
  %v1300 = vmul.f32 %v1299, 0.6931472
  %v1301 = vlog2.pop %v961
  %v1302 = vmul.f32 %v1301, 0.6931472
  %v1303 = vlog2.pop %v964
  %v1304 = vmul.f32 %v1303, 0.6931472
  %v1305 = vlog2.pop %v967
  %v1306 = vmul.f32 %v1305, 0.6931472
  %v1307 = vlog2.pop %v970
  %v1308 = vmul.f32 %v1307, 0.6931472
  %v1309 = vlog2.pop %v973
  %v1310 = vmul.f32 %v1309, 0.6931472
  %v1311 = vsub.f32 %v746, %v1280
  %v1312 = vsub.f32 %v747, %v1282
  %v1313 = vsub.f32 %v748, %v1284
  %v1314 = vsub.f32 %v749, %v1286
  %v1315 = vsub.f32 %v750, %v1288
  %v1316 = vsub.f32 %v751, %v1290
  %v1317 = vsub.f32 %v752, %v1292
  %v1318 = vsub.f32 %v753, %v1294
  %v1319 = vsub.f32 %v754, %v1296
  %v1320 = vsub.f32 %v755, %v1298
  %v1321 = vsub.f32 %v756, %v1300
  %v1322 = vsub.f32 %v757, %v1302
  %v1323 = vsub.f32 %v758, %v1304
  %v1324 = vsub.f32 %v759, %v1306
  %v1325 = vsub.f32 %v760, %v1308
  %v1326 = vsub.f32 %v761, %v1310
  %1343 = vrot.lane.b32.xlu0 %v1053, 64
  %v1344 = vpop.permute.xlu0 %1343
  %1345 = vrot.lane.b32.xlu0 %v1068, 64
  %v1346 = vpop.permute.xlu0 %1345
  %1347 = vrot.lane.b32.xlu0 %v1083, 64
  %v1348 = vpop.permute.xlu0 %1347
  %1349 = vrot.lane.b32.xlu0 %v1098, 64
  %v1350 = vpop.permute.xlu0 %1349
  %1351 = vrot.lane.b32.xlu0 %v1113, 64
  %v1352 = vpop.permute.xlu0 %1351
  %1353 = vrot.lane.b32.xlu0 %v1128, 64
  %v1354 = vpop.permute.xlu0 %1353
  %1355 = vrot.lane.b32.xlu0 %v1143, 64
  %v1356 = vpop.permute.xlu0 %1355
  %1357 = vrot.lane.b32.xlu0 %v1158, 64
  %v1358 = vpop.permute.xlu0 %1357
  %1359 = vrot.lane.b32.xlu0 %v1173, 64
  %v1360 = vpop.permute.xlu0 %1359
  %1361 = vrot.lane.b32.xlu0 %v1188, 64
  %v1362 = vpop.permute.xlu0 %1361
  %1363 = vrot.lane.b32.xlu0 %v1203, 64
  %v1364 = vpop.permute.xlu0 %1363
  %1365 = vrot.lane.b32.xlu0 %v1218, 64
  %v1366 = vpop.permute.xlu0 %1365
  %1367 = vrot.lane.b32.xlu0 %v1233, 64
  %v1368 = vpop.permute.xlu0 %1367
  %1369 = vrot.lane.b32.xlu0 %v1248, 64
  %v1370 = vpop.permute.xlu0 %1369
  %1371 = vrot.lane.b32.xlu0 %v1263, 64
  %v1372 = vpop.permute.xlu0 %1371
  %1373 = vrot.lane.b32.xlu0 %v1278, 64
  %v1374 = vpop.permute.xlu0 %1373
  %v1391 = vsub.f32 %v404, %v1344
  %v1392 = vsub.f32 %v405, %v1346
  %v1393 = vsub.f32 %v406, %v1348
  %v1394 = vsub.f32 %v407, %v1350
  %v1395 = vsub.f32 %v408, %v1352
  %v1396 = vsub.f32 %v409, %v1354
  %v1397 = vsub.f32 %v410, %v1356
  %v1398 = vsub.f32 %v411, %v1358
  %v1399 = vsub.f32 %v412, %v1360
  %v1400 = vsub.f32 %v413, %v1362
  %v1401 = vsub.f32 %v414, %v1364
  %v1402 = vsub.f32 %v415, %v1366
  %v1403 = vsub.f32 %v416, %v1368
  %v1404 = vsub.f32 %v417, %v1370
  %v1405 = vsub.f32 %v418, %v1372
  %v1406 = vsub.f32 %v419, %v1374
  %1407 = vrot.lane.b32.xlu0 %v1053, 62
  %v1408 = vpop.permute.xlu0 %1407
  %1409 = vrot.lane.b32.xlu0 %v1068, 62
  %v1410 = vpop.permute.xlu0 %1409
  %1411 = vrot.lane.b32.xlu0 %v1083, 62
  %v1412 = vpop.permute.xlu0 %1411
  %1413 = vrot.lane.b32.xlu0 %v1098, 62
  %v1414 = vpop.permute.xlu0 %1413
  %1415 = vrot.lane.b32.xlu0 %v1113, 62
  %v1416 = vpop.permute.xlu0 %1415
  %1417 = vrot.lane.b32.xlu0 %v1128, 62
  %v1418 = vpop.permute.xlu0 %1417
  %1419 = vrot.lane.b32.xlu0 %v1143, 62
  %v1420 = vpop.permute.xlu0 %1419
  %1421 = vrot.lane.b32.xlu0 %v1158, 62
  %v1422 = vpop.permute.xlu0 %1421
  %1423 = vrot.lane.b32.xlu0 %v1173, 62
  %v1424 = vpop.permute.xlu0 %1423
  %1425 = vrot.lane.b32.xlu0 %v1188, 62
  %v1426 = vpop.permute.xlu0 %1425
  %1427 = vrot.lane.b32.xlu0 %v1203, 62
  %v1428 = vpop.permute.xlu0 %1427
  %1429 = vrot.lane.b32.xlu0 %v1218, 62
  %v1430 = vpop.permute.xlu0 %1429
  %1431 = vrot.lane.b32.xlu0 %v1233, 62
  %v1432 = vpop.permute.xlu0 %1431
  %1433 = vrot.lane.b32.xlu0 %v1248, 62
  %v1434 = vpop.permute.xlu0 %1433
  %1435 = vrot.lane.b32.xlu0 %v1263, 62
  %v1436 = vpop.permute.xlu0 %1435
  %1437 = vrot.lane.b32.xlu0 %v1278, 62
  %v1438 = vpop.permute.xlu0 %1437
  %v1455 = vadd.f32 %v404, %v1408
  %v1456 = vadd.f32 %v405, %v1410
  %v1457 = vadd.f32 %v406, %v1412
  %v1458 = vadd.f32 %v407, %v1414
  %v1459 = vadd.f32 %v408, %v1416
  %v1460 = vadd.f32 %v409, %v1418
  %v1461 = vadd.f32 %v410, %v1420
  %v1462 = vadd.f32 %v411, %v1422
  %v1463 = vadd.f32 %v412, %v1424
  %v1464 = vadd.f32 %v413, %v1426
  %v1465 = vadd.f32 %v414, %v1428
  %v1466 = vadd.f32 %v415, %v1430
  %v1467 = vadd.f32 %v416, %v1432
  %v1468 = vadd.f32 %v417, %v1434
  %v1469 = vadd.f32 %v418, %v1436
  %v1470 = vadd.f32 %v419, %v1438
  %1471 = vrot.lane.b32.xlu0 %v404, 124
  %v1472 = vpop.permute.xlu0 %1471
  %1473 = vrot.lane.b32.xlu0 %v405, 124
  %v1474 = vpop.permute.xlu0 %1473
  %1475 = vrot.lane.b32.xlu0 %v406, 124
  %v1476 = vpop.permute.xlu0 %1475
  %1477 = vrot.lane.b32.xlu0 %v407, 124
  %v1478 = vpop.permute.xlu0 %1477
  %1479 = vrot.lane.b32.xlu0 %v408, 124
  %v1480 = vpop.permute.xlu0 %1479
  %1481 = vrot.lane.b32.xlu0 %v409, 124
  %v1482 = vpop.permute.xlu0 %1481
  %1483 = vrot.lane.b32.xlu0 %v410, 124
  %v1484 = vpop.permute.xlu0 %1483
  %1485 = vrot.lane.b32.xlu0 %v411, 124
  %v1486 = vpop.permute.xlu0 %1485
  %1487 = vrot.lane.b32.xlu0 %v412, 124
  %v1488 = vpop.permute.xlu0 %1487
  %1489 = vrot.lane.b32.xlu0 %v413, 124
  %v1490 = vpop.permute.xlu0 %1489
  %1491 = vrot.lane.b32.xlu0 %v414, 124
  %v1492 = vpop.permute.xlu0 %1491
  %1493 = vrot.lane.b32.xlu0 %v415, 124
  %v1494 = vpop.permute.xlu0 %1493
  %1495 = vrot.lane.b32.xlu0 %v416, 124
  %v1496 = vpop.permute.xlu0 %1495
  %1497 = vrot.lane.b32.xlu0 %v417, 124
  %v1498 = vpop.permute.xlu0 %1497
  %1499 = vrot.lane.b32.xlu0 %v418, 124
  %v1500 = vpop.permute.xlu0 %1499
  %1501 = vrot.lane.b32.xlu0 %v419, 124
  %v1502 = vpop.permute.xlu0 %1501
  %v1519 = vmin.f32 %v1455, %v1472
  %v1520 = vmin.f32 %v1456, %v1474
  %v1521 = vmin.f32 %v1457, %v1476
  %v1522 = vmin.f32 %v1458, %v1478
  %v1523 = vmin.f32 %v1459, %v1480
  %v1524 = vmin.f32 %v1460, %v1482
  %v1525 = vmin.f32 %v1461, %v1484
  %v1526 = vmin.f32 %v1462, %v1486
  %v1527 = vmin.f32 %v1463, %v1488
  %v1528 = vmin.f32 %v1464, %v1490
  %v1529 = vmin.f32 %v1465, %v1492
  %v1530 = vmin.f32 %v1466, %v1494
  %v1531 = vmin.f32 %v1467, %v1496
  %v1532 = vmin.f32 %v1468, %v1498
  %v1533 = vmin.f32 %v1469, %v1500
  %v1534 = vmin.f32 %v1470, %v1502
  %1535 = vrot.lane.b32.xlu0 %v404, 126
  %v1536 = vpop.permute.xlu0 %1535
  %1537 = vrot.lane.b32.xlu0 %v405, 126
  %v1538 = vpop.permute.xlu0 %1537
  %1539 = vrot.lane.b32.xlu0 %v406, 126
  %v1540 = vpop.permute.xlu0 %1539
  %1541 = vrot.lane.b32.xlu0 %v407, 126
  %v1542 = vpop.permute.xlu0 %1541
  %1543 = vrot.lane.b32.xlu0 %v408, 126
  %v1544 = vpop.permute.xlu0 %1543
  %1545 = vrot.lane.b32.xlu0 %v409, 126
  %v1546 = vpop.permute.xlu0 %1545
  %1547 = vrot.lane.b32.xlu0 %v410, 126
  %v1548 = vpop.permute.xlu0 %1547
  %1549 = vrot.lane.b32.xlu0 %v411, 126
  %v1550 = vpop.permute.xlu0 %1549
  %1551 = vrot.lane.b32.xlu0 %v412, 126
  %v1552 = vpop.permute.xlu0 %1551
  %1553 = vrot.lane.b32.xlu0 %v413, 126
  %v1554 = vpop.permute.xlu0 %1553
  %1555 = vrot.lane.b32.xlu0 %v414, 126
  %v1556 = vpop.permute.xlu0 %1555
  %1557 = vrot.lane.b32.xlu0 %v415, 126
  %v1558 = vpop.permute.xlu0 %1557
  %1559 = vrot.lane.b32.xlu0 %v416, 126
  %v1560 = vpop.permute.xlu0 %1559
  %1561 = vrot.lane.b32.xlu0 %v417, 126
  %v1562 = vpop.permute.xlu0 %1561
  %1563 = vrot.lane.b32.xlu0 %v418, 126
  %v1564 = vpop.permute.xlu0 %1563
  %1565 = vrot.lane.b32.xlu0 %v419, 126
  %v1566 = vpop.permute.xlu0 %1565
  %v1583 = vmax.f32 %v1391, %v1536
  %v1584 = vmax.f32 %v1392, %v1538
  %v1585 = vmax.f32 %v1393, %v1540
  %v1586 = vmax.f32 %v1394, %v1542
  %v1587 = vmax.f32 %v1395, %v1544
  %v1588 = vmax.f32 %v1396, %v1546
  %v1589 = vmax.f32 %v1397, %v1548
  %v1590 = vmax.f32 %v1398, %v1550
  %v1591 = vmax.f32 %v1399, %v1552
  %v1592 = vmax.f32 %v1400, %v1554
  %v1593 = vmax.f32 %v1401, %v1556
  %v1594 = vmax.f32 %v1402, %v1558
  %v1595 = vmax.f32 %v1403, %v1560
  %v1596 = vmax.f32 %v1404, %v1562
  %v1597 = vmax.f32 %v1405, %v1564
  %v1598 = vmax.f32 %v1406, %v1566
  %v1599 = vsub.f32 %v1519, %v1583
  %v1600 = vsub.f32 %v1520, %v1584
  %v1601 = vsub.f32 %v1521, %v1585
  %v1602 = vsub.f32 %v1522, %v1586
  %v1603 = vsub.f32 %v1523, %v1587
  %v1604 = vsub.f32 %v1524, %v1588
  %v1605 = vsub.f32 %v1525, %v1589
  %v1606 = vsub.f32 %v1526, %v1590
  %v1607 = vsub.f32 %v1527, %v1591
  %v1608 = vsub.f32 %v1528, %v1592
  %v1609 = vsub.f32 %v1529, %v1593
  %v1610 = vsub.f32 %v1530, %v1594
  %v1611 = vsub.f32 %v1531, %v1595
  %v1612 = vsub.f32 %v1532, %v1596
  %v1613 = vsub.f32 %v1533, %v1597
  %v1614 = vsub.f32 %v1534, %v1598
  %v1615 = vmax.f32 %v1599, 0.0
  %v1616 = vmax.f32 %v1600, 0.0
  %v1617 = vmax.f32 %v1601, 0.0
  %v1618 = vmax.f32 %v1602, 0.0
  %v1619 = vmax.f32 %v1603, 0.0
  %v1620 = vmax.f32 %v1604, 0.0
  %v1621 = vmax.f32 %v1605, 0.0
  %v1622 = vmax.f32 %v1606, 0.0
  %v1623 = vmax.f32 %v1607, 0.0
  %v1624 = vmax.f32 %v1608, 0.0
  %v1625 = vmax.f32 %v1609, 0.0
  %v1626 = vmax.f32 %v1610, 0.0
  %v1627 = vmax.f32 %v1611, 0.0
  %v1628 = vmax.f32 %v1612, 0.0
  %v1629 = vmax.f32 %v1613, 0.0
  %v1630 = vmax.f32 %v1614, 0.0
  %1647 = vrot.lane.b32.xlu0 %v1615, 127
  %v1648 = vpop.permute.xlu0 %1647
  %1649 = vrot.lane.b32.xlu0 %v1616, 127
  %v1650 = vpop.permute.xlu0 %1649
  %1651 = vrot.lane.b32.xlu0 %v1617, 127
  %v1652 = vpop.permute.xlu0 %1651
  %1653 = vrot.lane.b32.xlu0 %v1618, 127
  %v1654 = vpop.permute.xlu0 %1653
  %1655 = vrot.lane.b32.xlu0 %v1619, 127
  %v1656 = vpop.permute.xlu0 %1655
  %1657 = vrot.lane.b32.xlu0 %v1620, 127
  %v1658 = vpop.permute.xlu0 %1657
  %1659 = vrot.lane.b32.xlu0 %v1621, 127
  %v1660 = vpop.permute.xlu0 %1659
  %1661 = vrot.lane.b32.xlu0 %v1622, 127
  %v1662 = vpop.permute.xlu0 %1661
  %1663 = vrot.lane.b32.xlu0 %v1623, 127
  %v1664 = vpop.permute.xlu0 %1663
  %1665 = vrot.lane.b32.xlu0 %v1624, 127
  %v1666 = vpop.permute.xlu0 %1665
  %1667 = vrot.lane.b32.xlu0 %v1625, 127
  %v1668 = vpop.permute.xlu0 %1667
  %1669 = vrot.lane.b32.xlu0 %v1626, 127
  %v1670 = vpop.permute.xlu0 %1669
  %1671 = vrot.lane.b32.xlu0 %v1627, 127
  %v1672 = vpop.permute.xlu0 %1671
  %1673 = vrot.lane.b32.xlu0 %v1628, 127
  %v1674 = vpop.permute.xlu0 %1673
  %1675 = vrot.lane.b32.xlu0 %v1629, 127
  %v1676 = vpop.permute.xlu0 %1675
  %1677 = vrot.lane.b32.xlu0 %v1630, 127
  %v1678 = vpop.permute.xlu0 %1677
  %v1695 = vmul.f32 %v1615, %v1648
  %v1696 = vmul.f32 %v1616, %v1650
  %v1697 = vmul.f32 %v1617, %v1652
  %v1698 = vmul.f32 %v1618, %v1654
  %v1699 = vmul.f32 %v1619, %v1656
  %v1700 = vmul.f32 %v1620, %v1658
  %v1701 = vmul.f32 %v1621, %v1660
  %v1702 = vmul.f32 %v1622, %v1662
  %v1703 = vmul.f32 %v1623, %v1664
  %v1704 = vmul.f32 %v1624, %v1666
  %v1705 = vmul.f32 %v1625, %v1668
  %v1706 = vmul.f32 %v1626, %v1670
  %v1707 = vmul.f32 %v1627, %v1672
  %v1708 = vmul.f32 %v1628, %v1674
  %v1709 = vmul.f32 %v1629, %v1676
  %v1710 = vmul.f32 %v1630, %v1678
  %v1711 = vsub.f32 %v1455, %v1391
  %v1712 = vsub.f32 %v1456, %v1392
  %v1713 = vsub.f32 %v1457, %v1393
  %v1714 = vsub.f32 %v1458, %v1394
  %v1715 = vsub.f32 %v1459, %v1395
  %v1716 = vsub.f32 %v1460, %v1396
  %v1717 = vsub.f32 %v1461, %v1397
  %v1718 = vsub.f32 %v1462, %v1398
  %v1719 = vsub.f32 %v1463, %v1399
  %v1720 = vsub.f32 %v1464, %v1400
  %v1721 = vsub.f32 %v1465, %v1401
  %v1722 = vsub.f32 %v1466, %v1402
  %v1723 = vsub.f32 %v1467, %v1403
  %v1724 = vsub.f32 %v1468, %v1404
  %v1725 = vsub.f32 %v1469, %v1405
  %v1726 = vsub.f32 %v1470, %v1406
  %1743 = vrot.lane.b32.xlu0 %v1711, 127
  %v1744 = vpop.permute.xlu0 %1743
  %1745 = vrot.lane.b32.xlu0 %v1712, 127
  %v1746 = vpop.permute.xlu0 %1745
  %1747 = vrot.lane.b32.xlu0 %v1713, 127
  %v1748 = vpop.permute.xlu0 %1747
  %1749 = vrot.lane.b32.xlu0 %v1714, 127
  %v1750 = vpop.permute.xlu0 %1749
  %1751 = vrot.lane.b32.xlu0 %v1715, 127
  %v1752 = vpop.permute.xlu0 %1751
  %1753 = vrot.lane.b32.xlu0 %v1716, 127
  %v1754 = vpop.permute.xlu0 %1753
  %1755 = vrot.lane.b32.xlu0 %v1717, 127
  %v1756 = vpop.permute.xlu0 %1755
  %1757 = vrot.lane.b32.xlu0 %v1718, 127
  %v1758 = vpop.permute.xlu0 %1757
  %1759 = vrot.lane.b32.xlu0 %v1719, 127
  %v1760 = vpop.permute.xlu0 %1759
  %1761 = vrot.lane.b32.xlu0 %v1720, 127
  %v1762 = vpop.permute.xlu0 %1761
  %1763 = vrot.lane.b32.xlu0 %v1721, 127
  %v1764 = vpop.permute.xlu0 %1763
  %1765 = vrot.lane.b32.xlu0 %v1722, 127
  %v1766 = vpop.permute.xlu0 %1765
  %1767 = vrot.lane.b32.xlu0 %v1723, 127
  %v1768 = vpop.permute.xlu0 %1767
  %1769 = vrot.lane.b32.xlu0 %v1724, 127
  %v1770 = vpop.permute.xlu0 %1769
  %1771 = vrot.lane.b32.xlu0 %v1725, 127
  %v1772 = vpop.permute.xlu0 %1771
  %1773 = vrot.lane.b32.xlu0 %v1726, 127
  %v1774 = vpop.permute.xlu0 %1773
  %v1791 = vmul.f32 %v1711, %v1744
  %v1792 = vmul.f32 %v1712, %v1746
  %v1793 = vmul.f32 %v1713, %v1748
  %v1794 = vmul.f32 %v1714, %v1750
  %v1795 = vmul.f32 %v1715, %v1752
  %v1796 = vmul.f32 %v1716, %v1754
  %v1797 = vmul.f32 %v1717, %v1756
  %v1798 = vmul.f32 %v1718, %v1758
  %v1799 = vmul.f32 %v1719, %v1760
  %v1800 = vmul.f32 %v1720, %v1762
  %v1801 = vmul.f32 %v1721, %v1764
  %v1802 = vmul.f32 %v1722, %v1766
  %v1803 = vmul.f32 %v1723, %v1768
  %v1804 = vmul.f32 %v1724, %v1770
  %v1805 = vmul.f32 %v1725, %v1772
  %v1806 = vmul.f32 %v1726, %v1774
  %1807 = vrot.lane.b32.xlu0 %v404, 2
  %v1808 = vpop.permute.xlu0 %1807
  %1809 = vrot.lane.b32.xlu0 %v405, 2
  %v1810 = vpop.permute.xlu0 %1809
  %1811 = vrot.lane.b32.xlu0 %v406, 2
  %v1812 = vpop.permute.xlu0 %1811
  %1813 = vrot.lane.b32.xlu0 %v407, 2
  %v1814 = vpop.permute.xlu0 %1813
  %1815 = vrot.lane.b32.xlu0 %v408, 2
  %v1816 = vpop.permute.xlu0 %1815
  %1817 = vrot.lane.b32.xlu0 %v409, 2
  %v1818 = vpop.permute.xlu0 %1817
  %1819 = vrot.lane.b32.xlu0 %v410, 2
  %v1820 = vpop.permute.xlu0 %1819
  %1821 = vrot.lane.b32.xlu0 %v411, 2
  %v1822 = vpop.permute.xlu0 %1821
  %1823 = vrot.lane.b32.xlu0 %v412, 2
  %v1824 = vpop.permute.xlu0 %1823
  %1825 = vrot.lane.b32.xlu0 %v413, 2
  %v1826 = vpop.permute.xlu0 %1825
  %1827 = vrot.lane.b32.xlu0 %v414, 2
  %v1828 = vpop.permute.xlu0 %1827
  %1829 = vrot.lane.b32.xlu0 %v415, 2
  %v1830 = vpop.permute.xlu0 %1829
  %1831 = vrot.lane.b32.xlu0 %v416, 2
  %v1832 = vpop.permute.xlu0 %1831
  %1833 = vrot.lane.b32.xlu0 %v417, 2
  %v1834 = vpop.permute.xlu0 %1833
  %1835 = vrot.lane.b32.xlu0 %v418, 2
  %v1836 = vpop.permute.xlu0 %1835
  %1837 = vrot.lane.b32.xlu0 %v419, 2
  %v1838 = vpop.permute.xlu0 %1837
  %v1855 = vsub.f32 %v404, %v1808
  %v1856 = vsub.f32 %v405, %v1810
  %v1857 = vsub.f32 %v406, %v1812
  %v1858 = vsub.f32 %v407, %v1814
  %v1859 = vsub.f32 %v408, %v1816
  %v1860 = vsub.f32 %v409, %v1818
  %v1861 = vsub.f32 %v410, %v1820
  %v1862 = vsub.f32 %v411, %v1822
  %v1863 = vsub.f32 %v412, %v1824
  %v1864 = vsub.f32 %v413, %v1826
  %v1865 = vsub.f32 %v414, %v1828
  %v1866 = vsub.f32 %v415, %v1830
  %v1867 = vsub.f32 %v416, %v1832
  %v1868 = vsub.f32 %v417, %v1834
  %v1869 = vsub.f32 %v418, %v1836
  %v1870 = vsub.f32 %v419, %v1838
  %1887 = vrot.lane.b32.xlu0 %v1855, 127
  %v1888 = vpop.permute.xlu0 %1887
  %1889 = vrot.lane.b32.xlu0 %v1856, 127
  %v1890 = vpop.permute.xlu0 %1889
  %1891 = vrot.lane.b32.xlu0 %v1857, 127
  %v1892 = vpop.permute.xlu0 %1891
  %1893 = vrot.lane.b32.xlu0 %v1858, 127
  %v1894 = vpop.permute.xlu0 %1893
  %1895 = vrot.lane.b32.xlu0 %v1859, 127
  %v1896 = vpop.permute.xlu0 %1895
  %1897 = vrot.lane.b32.xlu0 %v1860, 127
  %v1898 = vpop.permute.xlu0 %1897
  %1899 = vrot.lane.b32.xlu0 %v1861, 127
  %v1900 = vpop.permute.xlu0 %1899
  %1901 = vrot.lane.b32.xlu0 %v1862, 127
  %v1902 = vpop.permute.xlu0 %1901
  %1903 = vrot.lane.b32.xlu0 %v1863, 127
  %v1904 = vpop.permute.xlu0 %1903
  %1905 = vrot.lane.b32.xlu0 %v1864, 127
  %v1906 = vpop.permute.xlu0 %1905
  %1907 = vrot.lane.b32.xlu0 %v1865, 127
  %v1908 = vpop.permute.xlu0 %1907
  %1909 = vrot.lane.b32.xlu0 %v1866, 127
  %v1910 = vpop.permute.xlu0 %1909
  %1911 = vrot.lane.b32.xlu0 %v1867, 127
  %v1912 = vpop.permute.xlu0 %1911
  %1913 = vrot.lane.b32.xlu0 %v1868, 127
  %v1914 = vpop.permute.xlu0 %1913
  %1915 = vrot.lane.b32.xlu0 %v1869, 127
  %v1916 = vpop.permute.xlu0 %1915
  %1917 = vrot.lane.b32.xlu0 %v1870, 127
  %v1918 = vpop.permute.xlu0 %1917
  %v1935 = vmul.f32 %v1855, %v1888
  %v1936 = vmul.f32 %v1856, %v1890
  %v1937 = vmul.f32 %v1857, %v1892
  %v1938 = vmul.f32 %v1858, %v1894
  %v1939 = vmul.f32 %v1859, %v1896
  %v1940 = vmul.f32 %v1860, %v1898
  %v1941 = vmul.f32 %v1861, %v1900
  %v1942 = vmul.f32 %v1862, %v1902
  %v1943 = vmul.f32 %v1863, %v1904
  %v1944 = vmul.f32 %v1864, %v1906
  %v1945 = vmul.f32 %v1865, %v1908
  %v1946 = vmul.f32 %v1866, %v1910
  %v1947 = vmul.f32 %v1867, %v1912
  %v1948 = vmul.f32 %v1868, %v1914
  %v1949 = vmul.f32 %v1869, %v1916
  %v1950 = vmul.f32 %v1870, %v1918
  %1967 = vrot.lane.b32.xlu0 %v1935, 124
  %v1968 = vpop.permute.xlu0 %1967
  %1969 = vrot.lane.b32.xlu0 %v1936, 124
  %v1970 = vpop.permute.xlu0 %1969
  %1971 = vrot.lane.b32.xlu0 %v1937, 124
  %v1972 = vpop.permute.xlu0 %1971
  %1973 = vrot.lane.b32.xlu0 %v1938, 124
  %v1974 = vpop.permute.xlu0 %1973
  %1975 = vrot.lane.b32.xlu0 %v1939, 124
  %v1976 = vpop.permute.xlu0 %1975
  %1977 = vrot.lane.b32.xlu0 %v1940, 124
  %v1978 = vpop.permute.xlu0 %1977
  %1979 = vrot.lane.b32.xlu0 %v1941, 124
  %v1980 = vpop.permute.xlu0 %1979
  %1981 = vrot.lane.b32.xlu0 %v1942, 124
  %v1982 = vpop.permute.xlu0 %1981
  %1983 = vrot.lane.b32.xlu0 %v1943, 124
  %v1984 = vpop.permute.xlu0 %1983
  %1985 = vrot.lane.b32.xlu0 %v1944, 124
  %v1986 = vpop.permute.xlu0 %1985
  %1987 = vrot.lane.b32.xlu0 %v1945, 124
  %v1988 = vpop.permute.xlu0 %1987
  %1989 = vrot.lane.b32.xlu0 %v1946, 124
  %v1990 = vpop.permute.xlu0 %1989
  %1991 = vrot.lane.b32.xlu0 %v1947, 124
  %v1992 = vpop.permute.xlu0 %1991
  %1993 = vrot.lane.b32.xlu0 %v1948, 124
  %v1994 = vpop.permute.xlu0 %1993
  %1995 = vrot.lane.b32.xlu0 %v1949, 124
  %v1996 = vpop.permute.xlu0 %1995
  %1997 = vrot.lane.b32.xlu0 %v1950, 124
  %v1998 = vpop.permute.xlu0 %1997
  %v2015 = vadd.f32 %v1791, %v1968
  %v2016 = vadd.f32 %v1792, %v1970
  %v2017 = vadd.f32 %v1793, %v1972
  %v2018 = vadd.f32 %v1794, %v1974
  %v2019 = vadd.f32 %v1795, %v1976
  %v2020 = vadd.f32 %v1796, %v1978
  %v2021 = vadd.f32 %v1797, %v1980
  %v2022 = vadd.f32 %v1798, %v1982
  %v2023 = vadd.f32 %v1799, %v1984
  %v2024 = vadd.f32 %v1800, %v1986
  %v2025 = vadd.f32 %v1801, %v1988
  %v2026 = vadd.f32 %v1802, %v1990
  %v2027 = vadd.f32 %v1803, %v1992
  %v2028 = vadd.f32 %v1804, %v1994
  %v2029 = vadd.f32 %v1805, %v1996
  %v2030 = vadd.f32 %v1806, %v1998
  %v2031 = vsub.f32 %v2015, %v1695
  %v2032 = vsub.f32 %v2016, %v1696
  %v2033 = vsub.f32 %v2017, %v1697
  %v2034 = vsub.f32 %v2018, %v1698
  %v2035 = vsub.f32 %v2019, %v1699
  %v2036 = vsub.f32 %v2020, %v1700
  %v2037 = vsub.f32 %v2021, %v1701
  %v2038 = vsub.f32 %v2022, %v1702
  %v2039 = vsub.f32 %v2023, %v1703
  %v2040 = vsub.f32 %v2024, %v1704
  %v2041 = vsub.f32 %v2025, %v1705
  %v2042 = vsub.f32 %v2026, %v1706
  %v2043 = vsub.f32 %v2027, %v1707
  %v2044 = vsub.f32 %v2028, %v1708
  %v2045 = vsub.f32 %v2029, %v1709
  %v2046 = vsub.f32 %v2030, %v1710
  %v2047 = vadd.f32 %v2031, 1e-07
  %v2048 = vadd.f32 %v2032, 1e-07
  %v2049 = vadd.f32 %v2033, 1e-07
  %v2050 = vadd.f32 %v2034, 1e-07
  %v2051 = vadd.f32 %v2035, 1e-07
  %v2052 = vadd.f32 %v2036, 1e-07
  %v2053 = vadd.f32 %v2037, 1e-07
  %v2054 = vadd.f32 %v2038, 1e-07
  %v2055 = vadd.f32 %v2039, 1e-07
  %v2056 = vadd.f32 %v2040, 1e-07
  %v2057 = vadd.f32 %v2041, 1e-07
  %v2058 = vadd.f32 %v2042, 1e-07
  %v2059 = vadd.f32 %v2043, 1e-07
  %v2060 = vadd.f32 %v2044, 1e-07
  %v2061 = vadd.f32 %v2045, 1e-07
  %v2062 = vadd.f32 %v2046, 1e-07
  %v2063 = vrcp.pop %v2047
  %v2064 = vmul.f32 %v2047, %v2063
  %v2065 = vsub.f32 1.0, %v2064
  %v2066 = vmul.f32 %v2063, %v2065
  %v2067 = vadd.f32 %v2063, %v2066
  %vm2068 = vweird.f32 %v2047
  %vm2069 = vweird.f32 %v2063
  %vm2070 = vmor %vm2068, %vm2069
  %v2071 = vsel %vm2070, %v2063, %v2067
  %v2072 = vand.u32 2147483647, %v2047
  %vm2073 = vcmp.eq.f32.partialorder %v2072, 8.507059e+37
  %v2074 = vand.u32 %v2047, 2147483648
  %v2075 = vor.u32 1.1754944e-38, %v2074
  %v2076 = vsel %vm2073, %v2075, %v2071
  %v2077 = vmul.f32 %v1695, %v2076
  %v2078 = vrcp.pop %v2048
  %v2079 = vmul.f32 %v2048, %v2078
  %v2080 = vsub.f32 1.0, %v2079
  %v2081 = vmul.f32 %v2078, %v2080
  %v2082 = vadd.f32 %v2078, %v2081
  %vm2083 = vweird.f32 %v2048
  %vm2084 = vweird.f32 %v2078
  %vm2085 = vmor %vm2083, %vm2084
  %v2086 = vsel %vm2085, %v2078, %v2082
  %v2087 = vand.u32 2147483647, %v2048
  %vm2088 = vcmp.eq.f32.partialorder %v2087, 8.507059e+37
  %v2089 = vand.u32 %v2048, 2147483648
  %v2090 = vor.u32 1.1754944e-38, %v2089
  %v2091 = vsel %vm2088, %v2090, %v2086
  %v2092 = vmul.f32 %v1696, %v2091
  %v2093 = vrcp.pop %v2049
  %v2094 = vmul.f32 %v2049, %v2093
  %v2095 = vsub.f32 1.0, %v2094
  %v2096 = vmul.f32 %v2093, %v2095
  %v2097 = vadd.f32 %v2093, %v2096
  %vm2098 = vweird.f32 %v2049
  %vm2099 = vweird.f32 %v2093
  %vm2100 = vmor %vm2098, %vm2099
  %v2101 = vsel %vm2100, %v2093, %v2097
  %v2102 = vand.u32 2147483647, %v2049
  %vm2103 = vcmp.eq.f32.partialorder %v2102, 8.507059e+37
  %v2104 = vand.u32 %v2049, 2147483648
  %v2105 = vor.u32 1.1754944e-38, %v2104
  %v2106 = vsel %vm2103, %v2105, %v2101
  %v2107 = vmul.f32 %v1697, %v2106
  %v2108 = vrcp.pop %v2050
  %v2109 = vmul.f32 %v2050, %v2108
  %v2110 = vsub.f32 1.0, %v2109
  %v2111 = vmul.f32 %v2108, %v2110
  %v2112 = vadd.f32 %v2108, %v2111
  %vm2113 = vweird.f32 %v2050
  %vm2114 = vweird.f32 %v2108
  %vm2115 = vmor %vm2113, %vm2114
  %v2116 = vsel %vm2115, %v2108, %v2112
  %v2117 = vand.u32 2147483647, %v2050
  %vm2118 = vcmp.eq.f32.partialorder %v2117, 8.507059e+37
  %v2119 = vand.u32 %v2050, 2147483648
  %v2120 = vor.u32 1.1754944e-38, %v2119
  %v2121 = vsel %vm2118, %v2120, %v2116
  %v2122 = vmul.f32 %v1698, %v2121
  %v2123 = vrcp.pop %v2051
  %v2124 = vmul.f32 %v2051, %v2123
  %v2125 = vsub.f32 1.0, %v2124
  %v2126 = vmul.f32 %v2123, %v2125
  %v2127 = vadd.f32 %v2123, %v2126
  %vm2128 = vweird.f32 %v2051
  %vm2129 = vweird.f32 %v2123
  %vm2130 = vmor %vm2128, %vm2129
  %v2131 = vsel %vm2130, %v2123, %v2127
  %v2132 = vand.u32 2147483647, %v2051
  %vm2133 = vcmp.eq.f32.partialorder %v2132, 8.507059e+37
  %v2134 = vand.u32 %v2051, 2147483648
  %v2135 = vor.u32 1.1754944e-38, %v2134
  %v2136 = vsel %vm2133, %v2135, %v2131
  %v2137 = vmul.f32 %v1699, %v2136
  %v2138 = vrcp.pop %v2052
  %v2139 = vmul.f32 %v2052, %v2138
  %v2140 = vsub.f32 1.0, %v2139
  %v2141 = vmul.f32 %v2138, %v2140
  %v2142 = vadd.f32 %v2138, %v2141
  %vm2143 = vweird.f32 %v2052
  %vm2144 = vweird.f32 %v2138
  %vm2145 = vmor %vm2143, %vm2144
  %v2146 = vsel %vm2145, %v2138, %v2142
  %v2147 = vand.u32 2147483647, %v2052
  %vm2148 = vcmp.eq.f32.partialorder %v2147, 8.507059e+37
  %v2149 = vand.u32 %v2052, 2147483648
  %v2150 = vor.u32 1.1754944e-38, %v2149
  %v2151 = vsel %vm2148, %v2150, %v2146
  %v2152 = vmul.f32 %v1700, %v2151
  %v2153 = vrcp.pop %v2053
  %v2154 = vmul.f32 %v2053, %v2153
  %v2155 = vsub.f32 1.0, %v2154
  %v2156 = vmul.f32 %v2153, %v2155
  %v2157 = vadd.f32 %v2153, %v2156
  %vm2158 = vweird.f32 %v2053
  %vm2159 = vweird.f32 %v2153
  %vm2160 = vmor %vm2158, %vm2159
  %v2161 = vsel %vm2160, %v2153, %v2157
  %v2162 = vand.u32 2147483647, %v2053
  %vm2163 = vcmp.eq.f32.partialorder %v2162, 8.507059e+37
  %v2164 = vand.u32 %v2053, 2147483648
  %v2165 = vor.u32 1.1754944e-38, %v2164
  %v2166 = vsel %vm2163, %v2165, %v2161
  %v2167 = vmul.f32 %v1701, %v2166
  %v2168 = vrcp.pop %v2054
  %v2169 = vmul.f32 %v2054, %v2168
  %v2170 = vsub.f32 1.0, %v2169
  %v2171 = vmul.f32 %v2168, %v2170
  %v2172 = vadd.f32 %v2168, %v2171
  %vm2173 = vweird.f32 %v2054
  %vm2174 = vweird.f32 %v2168
  %vm2175 = vmor %vm2173, %vm2174
  %v2176 = vsel %vm2175, %v2168, %v2172
  %v2177 = vand.u32 2147483647, %v2054
  %vm2178 = vcmp.eq.f32.partialorder %v2177, 8.507059e+37
  %v2179 = vand.u32 %v2054, 2147483648
  %v2180 = vor.u32 1.1754944e-38, %v2179
  %v2181 = vsel %vm2178, %v2180, %v2176
  %v2182 = vmul.f32 %v1702, %v2181
  %v2183 = vrcp.pop %v2055
  %v2184 = vmul.f32 %v2055, %v2183
  %v2185 = vsub.f32 1.0, %v2184
  %v2186 = vmul.f32 %v2183, %v2185
  %v2187 = vadd.f32 %v2183, %v2186
  %vm2188 = vweird.f32 %v2055
  %vm2189 = vweird.f32 %v2183
  %vm2190 = vmor %vm2188, %vm2189
  %v2191 = vsel %vm2190, %v2183, %v2187
  %v2192 = vand.u32 2147483647, %v2055
  %vm2193 = vcmp.eq.f32.partialorder %v2192, 8.507059e+37
  %v2194 = vand.u32 %v2055, 2147483648
  %v2195 = vor.u32 1.1754944e-38, %v2194
  %v2196 = vsel %vm2193, %v2195, %v2191
  %v2197 = vmul.f32 %v1703, %v2196
  %v2198 = vrcp.pop %v2056
  %v2199 = vmul.f32 %v2056, %v2198
  %v2200 = vsub.f32 1.0, %v2199
  %v2201 = vmul.f32 %v2198, %v2200
  %v2202 = vadd.f32 %v2198, %v2201
  %vm2203 = vweird.f32 %v2056
  %vm2204 = vweird.f32 %v2198
  %vm2205 = vmor %vm2203, %vm2204
  %v2206 = vsel %vm2205, %v2198, %v2202
  %v2207 = vand.u32 2147483647, %v2056
  %vm2208 = vcmp.eq.f32.partialorder %v2207, 8.507059e+37
  %v2209 = vand.u32 %v2056, 2147483648
  %v2210 = vor.u32 1.1754944e-38, %v2209
  %v2211 = vsel %vm2208, %v2210, %v2206
  %v2212 = vmul.f32 %v1704, %v2211
  %v2213 = vrcp.pop %v2057
  %v2214 = vmul.f32 %v2057, %v2213
  %v2215 = vsub.f32 1.0, %v2214
  %v2216 = vmul.f32 %v2213, %v2215
  %v2217 = vadd.f32 %v2213, %v2216
  %vm2218 = vweird.f32 %v2057
  %vm2219 = vweird.f32 %v2213
  %vm2220 = vmor %vm2218, %vm2219
  %v2221 = vsel %vm2220, %v2213, %v2217
  %v2222 = vand.u32 2147483647, %v2057
  %vm2223 = vcmp.eq.f32.partialorder %v2222, 8.507059e+37
  %v2224 = vand.u32 %v2057, 2147483648
  %v2225 = vor.u32 1.1754944e-38, %v2224
  %v2226 = vsel %vm2223, %v2225, %v2221
  %v2227 = vmul.f32 %v1705, %v2226
  %v2228 = vrcp.pop %v2058
  %v2229 = vmul.f32 %v2058, %v2228
  %v2230 = vsub.f32 1.0, %v2229
  %v2231 = vmul.f32 %v2228, %v2230
  %v2232 = vadd.f32 %v2228, %v2231
  %vm2233 = vweird.f32 %v2058
  %vm2234 = vweird.f32 %v2228
  %vm2235 = vmor %vm2233, %vm2234
  %v2236 = vsel %vm2235, %v2228, %v2232
  %v2237 = vand.u32 2147483647, %v2058
  %vm2238 = vcmp.eq.f32.partialorder %v2237, 8.507059e+37
  %v2239 = vand.u32 %v2058, 2147483648
  %v2240 = vor.u32 1.1754944e-38, %v2239
  %v2241 = vsel %vm2238, %v2240, %v2236
  %v2242 = vmul.f32 %v1706, %v2241
  %v2243 = vrcp.pop %v2059
  %v2244 = vmul.f32 %v2059, %v2243
  %v2245 = vsub.f32 1.0, %v2244
  %v2246 = vmul.f32 %v2243, %v2245
  %v2247 = vadd.f32 %v2243, %v2246
  %vm2248 = vweird.f32 %v2059
  %vm2249 = vweird.f32 %v2243
  %vm2250 = vmor %vm2248, %vm2249
  %v2251 = vsel %vm2250, %v2243, %v2247
  %v2252 = vand.u32 2147483647, %v2059
  %vm2253 = vcmp.eq.f32.partialorder %v2252, 8.507059e+37
  %v2254 = vand.u32 %v2059, 2147483648
  %v2255 = vor.u32 1.1754944e-38, %v2254
  %v2256 = vsel %vm2253, %v2255, %v2251
  %v2257 = vmul.f32 %v1707, %v2256
  %v2258 = vrcp.pop %v2060
  %v2259 = vmul.f32 %v2060, %v2258
  %v2260 = vsub.f32 1.0, %v2259
  %v2261 = vmul.f32 %v2258, %v2260
  %v2262 = vadd.f32 %v2258, %v2261
  %vm2263 = vweird.f32 %v2060
  %vm2264 = vweird.f32 %v2258
  %vm2265 = vmor %vm2263, %vm2264
  %v2266 = vsel %vm2265, %v2258, %v2262
  %v2267 = vand.u32 2147483647, %v2060
  %vm2268 = vcmp.eq.f32.partialorder %v2267, 8.507059e+37
  %v2269 = vand.u32 %v2060, 2147483648
  %v2270 = vor.u32 1.1754944e-38, %v2269
  %v2271 = vsel %vm2268, %v2270, %v2266
  %v2272 = vmul.f32 %v1708, %v2271
  %v2273 = vrcp.pop %v2061
  %v2274 = vmul.f32 %v2061, %v2273
  %v2275 = vsub.f32 1.0, %v2274
  %v2276 = vmul.f32 %v2273, %v2275
  %v2277 = vadd.f32 %v2273, %v2276
  %vm2278 = vweird.f32 %v2061
  %vm2279 = vweird.f32 %v2273
  %vm2280 = vmor %vm2278, %vm2279
  %v2281 = vsel %vm2280, %v2273, %v2277
  %v2282 = vand.u32 2147483647, %v2061
  %vm2283 = vcmp.eq.f32.partialorder %v2282, 8.507059e+37
  %v2284 = vand.u32 %v2061, 2147483648
  %v2285 = vor.u32 1.1754944e-38, %v2284
  %v2286 = vsel %vm2283, %v2285, %v2281
  %v2287 = vmul.f32 %v1709, %v2286
  %v2288 = vrcp.pop %v2062
  %v2289 = vmul.f32 %v2062, %v2288
  %v2290 = vsub.f32 1.0, %v2289
  %v2291 = vmul.f32 %v2288, %v2290
  %v2292 = vadd.f32 %v2288, %v2291
  %vm2293 = vweird.f32 %v2062
  %vm2294 = vweird.f32 %v2288
  %vm2295 = vmor %vm2293, %vm2294
  %v2296 = vsel %vm2295, %v2288, %v2292
  %v2297 = vand.u32 2147483647, %v2062
  %vm2298 = vcmp.eq.f32.partialorder %v2297, 8.507059e+37
  %v2299 = vand.u32 %v2062, 2147483648
  %v2300 = vor.u32 1.1754944e-38, %v2299
  %v2301 = vsel %vm2298, %v2300, %v2296
  %v2302 = vmul.f32 %v1710, %v2301
  %v2303 = vsub.f32 1.0, %v2077
  %v2304 = vsub.f32 1.0, %v2092
  %v2305 = vsub.f32 1.0, %v2107
  %v2306 = vsub.f32 1.0, %v2122
  %v2307 = vsub.f32 1.0, %v2137
  %v2308 = vsub.f32 1.0, %v2152
  %v2309 = vsub.f32 1.0, %v2167
  %v2310 = vsub.f32 1.0, %v2182
  %v2311 = vsub.f32 1.0, %v2197
  %v2312 = vsub.f32 1.0, %v2212
  %v2313 = vsub.f32 1.0, %v2227
  %v2314 = vsub.f32 1.0, %v2242
  %v2315 = vsub.f32 1.0, %v2257
  %v2316 = vsub.f32 1.0, %v2272
  %v2317 = vsub.f32 1.0, %v2287
  %v2318 = vsub.f32 1.0, %v2302
  %2335 = vrot.lane.b32.xlu0 %v485, 121
  %v2336 = vpop.permute.xlu0 %2335
  %2337 = vrot.lane.b32.xlu0 %v486, 121
  %v2338 = vpop.permute.xlu0 %2337
  %2339 = vrot.lane.b32.xlu0 %v487, 121
  %v2340 = vpop.permute.xlu0 %2339
  %2341 = vrot.lane.b32.xlu0 %v488, 121
  %v2342 = vpop.permute.xlu0 %2341
  %2343 = vrot.lane.b32.xlu0 %v489, 121
  %v2344 = vpop.permute.xlu0 %2343
  %2345 = vrot.lane.b32.xlu0 %v490, 121
  %v2346 = vpop.permute.xlu0 %2345
  %2347 = vrot.lane.b32.xlu0 %v491, 121
  %v2348 = vpop.permute.xlu0 %2347
  %2349 = vrot.lane.b32.xlu0 %v492, 121
  %v2350 = vpop.permute.xlu0 %2349
  %2351 = vrot.lane.b32.xlu0 %v493, 121
  %v2352 = vpop.permute.xlu0 %2351
  %2353 = vrot.lane.b32.xlu0 %v494, 121
  %v2354 = vpop.permute.xlu0 %2353
  %2355 = vrot.lane.b32.xlu0 %v495, 121
  %v2356 = vpop.permute.xlu0 %2355
  %2357 = vrot.lane.b32.xlu0 %v496, 121
  %v2358 = vpop.permute.xlu0 %2357
  %2359 = vrot.lane.b32.xlu0 %v497, 121
  %v2360 = vpop.permute.xlu0 %2359
  %2361 = vrot.lane.b32.xlu0 %v498, 121
  %v2362 = vpop.permute.xlu0 %2361
  %2363 = vrot.lane.b32.xlu0 %v499, 121
  %v2364 = vpop.permute.xlu0 %2363
  %2365 = vrot.lane.b32.xlu0 %v500, 121
  %v2366 = vpop.permute.xlu0 %2365
  %v2383 = vmul.f32 %v2303, %v2336
  %v2384 = vmul.f32 %v2304, %v2338
  %v2385 = vmul.f32 %v2305, %v2340
  %v2386 = vmul.f32 %v2306, %v2342
  %v2387 = vmul.f32 %v2307, %v2344
  %v2388 = vmul.f32 %v2308, %v2346
  %v2389 = vmul.f32 %v2309, %v2348
  %v2390 = vmul.f32 %v2310, %v2350
  %v2391 = vmul.f32 %v2311, %v2352
  %v2392 = vmul.f32 %v2312, %v2354
  %v2393 = vmul.f32 %v2313, %v2356
  %v2394 = vmul.f32 %v2314, %v2358
  %v2395 = vmul.f32 %v2315, %v2360
  %v2396 = vmul.f32 %v2316, %v2362
  %v2397 = vmul.f32 %v2317, %v2364
  %v2398 = vmul.f32 %v2318, %v2366
  %v2399 = vmax.f32 %v333, 0.0
  %v2400 = vmax.f32 %v335, 0.0
  %v2401 = vmax.f32 %v338, 0.0
  %v2402 = vmax.f32 %v340, 0.0
  %v2403 = vmax.f32 %v343, 0.0
  %v2404 = vmax.f32 %v345, 0.0
  %v2405 = vmax.f32 %v348, 0.0
  %v2406 = vmax.f32 %v350, 0.0
  %v2407 = vmax.f32 %v353, 0.0
  %v2408 = vmax.f32 %v355, 0.0
  %v2409 = vmax.f32 %v358, 0.0
  %v2410 = vmax.f32 %v360, 0.0
  %v2411 = vmax.f32 %v363, 0.0
  %v2412 = vmax.f32 %v365, 0.0
  %v2413 = vmax.f32 %v368, 0.0
  %v2414 = vmax.f32 %v370, 0.0
  %2431 = vrot.lane.b32.xlu0 %v372, 64
  %v2432 = vpop.permute.xlu0 %2431
  %2433 = vrot.lane.b32.xlu0 %v373, 64
  %v2434 = vpop.permute.xlu0 %2433
  %2435 = vrot.lane.b32.xlu0 %v374, 64
  %v2436 = vpop.permute.xlu0 %2435
  %2437 = vrot.lane.b32.xlu0 %v375, 64
  %v2438 = vpop.permute.xlu0 %2437
  %2439 = vrot.lane.b32.xlu0 %v376, 64
  %v2440 = vpop.permute.xlu0 %2439
  %2441 = vrot.lane.b32.xlu0 %v377, 64
  %v2442 = vpop.permute.xlu0 %2441
  %2443 = vrot.lane.b32.xlu0 %v378, 64
  %v2444 = vpop.permute.xlu0 %2443
  %2445 = vrot.lane.b32.xlu0 %v379, 64
  %v2446 = vpop.permute.xlu0 %2445
  %2447 = vrot.lane.b32.xlu0 %v380, 64
  %v2448 = vpop.permute.xlu0 %2447
  %2449 = vrot.lane.b32.xlu0 %v381, 64
  %v2450 = vpop.permute.xlu0 %2449
  %2451 = vrot.lane.b32.xlu0 %v382, 64
  %v2452 = vpop.permute.xlu0 %2451
  %2453 = vrot.lane.b32.xlu0 %v383, 64
  %v2454 = vpop.permute.xlu0 %2453
  %2455 = vrot.lane.b32.xlu0 %v384, 64
  %v2456 = vpop.permute.xlu0 %2455
  %2457 = vrot.lane.b32.xlu0 %v385, 64
  %v2458 = vpop.permute.xlu0 %2457
  %2459 = vrot.lane.b32.xlu0 %v386, 64
  %v2460 = vpop.permute.xlu0 %2459
  %2461 = vrot.lane.b32.xlu0 %v387, 64
  %v2462 = vpop.permute.xlu0 %2461
  %v2479 = vmul.f32 %v333, %v2432
  %v2480 = vmul.f32 %v335, %v2434
  %v2481 = vmul.f32 %v338, %v2436
  %v2482 = vmul.f32 %v340, %v2438
  %v2483 = vmul.f32 %v343, %v2440
  %v2484 = vmul.f32 %v345, %v2442
  %v2485 = vmul.f32 %v348, %v2444
  %v2486 = vmul.f32 %v350, %v2446
  %v2487 = vmul.f32 %v353, %v2448
  %v2488 = vmul.f32 %v355, %v2450
  %v2489 = vmul.f32 %v358, %v2452
  %v2490 = vmul.f32 %v360, %v2454
  %v2491 = vmul.f32 %v363, %v2456
  %v2492 = vmul.f32 %v365, %v2458
  %v2493 = vmul.f32 %v368, %v2460
  %v2494 = vmul.f32 %v370, %v2462
  %v2495 = vsub.f32 %v2399, %v2479
  %v2496 = vsub.f32 %v2400, %v2480
  %v2497 = vsub.f32 %v2401, %v2481
  %v2498 = vsub.f32 %v2402, %v2482
  %v2499 = vsub.f32 %v2403, %v2483
  %v2500 = vsub.f32 %v2404, %v2484
  %v2501 = vsub.f32 %v2405, %v2485
  %v2502 = vsub.f32 %v2406, %v2486
  %v2503 = vsub.f32 %v2407, %v2487
  %v2504 = vsub.f32 %v2408, %v2488
  %v2505 = vsub.f32 %v2409, %v2489
  %v2506 = vsub.f32 %v2410, %v2490
  %v2507 = vsub.f32 %v2411, %v2491
  %v2508 = vsub.f32 %v2412, %v2492
  %v2509 = vsub.f32 %v2413, %v2493
  %v2510 = vsub.f32 %v2414, %v2494
  %v2511 = vand.u32 2147483647, %v333
  %v2512 = vand.u32 2147483647, %v335
  %v2513 = vand.u32 2147483647, %v338
  %v2514 = vand.u32 2147483647, %v340
  %v2515 = vand.u32 2147483647, %v343
  %v2516 = vand.u32 2147483647, %v345
  %v2517 = vand.u32 2147483647, %v348
  %v2518 = vand.u32 2147483647, %v350
  %v2519 = vand.u32 2147483647, %v353
  %v2520 = vand.u32 2147483647, %v355
  %v2521 = vand.u32 2147483647, %v358
  %v2522 = vand.u32 2147483647, %v360
  %v2523 = vand.u32 2147483647, %v363
  %v2524 = vand.u32 2147483647, %v365
  %v2525 = vand.u32 2147483647, %v368
  %v2526 = vand.u32 2147483647, %v370
  %v2527 = vsub.f32 0.0, %v2511
  %v2528 = vsub.f32 0.0, %v2512
  %v2529 = vsub.f32 0.0, %v2513
  %v2530 = vsub.f32 0.0, %v2514
  %v2531 = vsub.f32 0.0, %v2515
  %v2532 = vsub.f32 0.0, %v2516
  %v2533 = vsub.f32 0.0, %v2517
  %v2534 = vsub.f32 0.0, %v2518
  %v2535 = vsub.f32 0.0, %v2519
  %v2536 = vsub.f32 0.0, %v2520
  %v2537 = vsub.f32 0.0, %v2521
  %v2538 = vsub.f32 0.0, %v2522
  %v2539 = vsub.f32 0.0, %v2523
  %v2540 = vsub.f32 0.0, %v2524
  %v2541 = vsub.f32 0.0, %v2525
  %v2542 = vsub.f32 0.0, %v2526
  %v2543 = vmul.f32 %v2527, 1.442695
  %v2544 = vpow.pop %v2543
  %v2545 = vmul.f32 %v2528, 1.442695
  %v2546 = vpow.pop %v2545
  %v2547 = vmul.f32 %v2529, 1.442695
  %v2548 = vpow.pop %v2547
  %v2549 = vmul.f32 %v2530, 1.442695
  %v2550 = vpow.pop %v2549
  %v2551 = vmul.f32 %v2531, 1.442695
  %v2552 = vpow.pop %v2551
  %v2553 = vmul.f32 %v2532, 1.442695
  %v2554 = vpow.pop %v2553
  %v2555 = vmul.f32 %v2533, 1.442695
  %v2556 = vpow.pop %v2555
  %v2557 = vmul.f32 %v2534, 1.442695
  %v2558 = vpow.pop %v2557
  %v2559 = vmul.f32 %v2535, 1.442695
  %v2560 = vpow.pop %v2559
  %v2561 = vmul.f32 %v2536, 1.442695
  %v2562 = vpow.pop %v2561
  %v2563 = vmul.f32 %v2537, 1.442695
  %v2564 = vpow.pop %v2563
  %v2565 = vmul.f32 %v2538, 1.442695
  %v2566 = vpow.pop %v2565
  %v2567 = vmul.f32 %v2539, 1.442695
  %v2568 = vpow.pop %v2567
  %v2569 = vmul.f32 %v2540, 1.442695
  %v2570 = vpow.pop %v2569
  %v2571 = vmul.f32 %v2541, 1.442695
  %v2572 = vpow.pop %v2571
  %v2573 = vmul.f32 %v2542, 1.442695
  %v2574 = vpow.pop %v2573
  %v2575 = vadd.f32 %v2544, 1.0
  %v2576 = vadd.f32 %v2546, 1.0
  %v2577 = vadd.f32 %v2548, 1.0
  %v2578 = vadd.f32 %v2550, 1.0
  %v2579 = vadd.f32 %v2552, 1.0
  %v2580 = vadd.f32 %v2554, 1.0
  %v2581 = vadd.f32 %v2556, 1.0
  %v2582 = vadd.f32 %v2558, 1.0
  %v2583 = vadd.f32 %v2560, 1.0
  %v2584 = vadd.f32 %v2562, 1.0
  %v2585 = vadd.f32 %v2564, 1.0
  %v2586 = vadd.f32 %v2566, 1.0
  %v2587 = vadd.f32 %v2568, 1.0
  %v2588 = vadd.f32 %v2570, 1.0
  %v2589 = vadd.f32 %v2572, 1.0
  %v2590 = vadd.f32 %v2574, 1.0
  %v2591 = vlog2.pop %v2575
  %v2592 = vmul.f32 %v2591, 0.6931472
  %v2593 = vlog2.pop %v2576
  %v2594 = vmul.f32 %v2593, 0.6931472
  %v2595 = vlog2.pop %v2577
  %v2596 = vmul.f32 %v2595, 0.6931472
  %v2597 = vlog2.pop %v2578
  %v2598 = vmul.f32 %v2597, 0.6931472
  %v2599 = vlog2.pop %v2579
  %v2600 = vmul.f32 %v2599, 0.6931472
  %v2601 = vlog2.pop %v2580
  %v2602 = vmul.f32 %v2601, 0.6931472
  %v2603 = vlog2.pop %v2581
  %v2604 = vmul.f32 %v2603, 0.6931472
  %v2605 = vlog2.pop %v2582
  %v2606 = vmul.f32 %v2605, 0.6931472
  %v2607 = vlog2.pop %v2583
  %v2608 = vmul.f32 %v2607, 0.6931472
  %v2609 = vlog2.pop %v2584
  %v2610 = vmul.f32 %v2609, 0.6931472
  %v2611 = vlog2.pop %v2585
  %v2612 = vmul.f32 %v2611, 0.6931472
  %v2613 = vlog2.pop %v2586
  %v2614 = vmul.f32 %v2613, 0.6931472
  %v2615 = vlog2.pop %v2587
  %v2616 = vmul.f32 %v2615, 0.6931472
  %v2617 = vlog2.pop %v2588
  %v2618 = vmul.f32 %v2617, 0.6931472
  %v2619 = vlog2.pop %v2589
  %v2620 = vmul.f32 %v2619, 0.6931472
  %v2621 = vlog2.pop %v2590
  %v2622 = vmul.f32 %v2621, 0.6931472
  %v2623 = vadd.f32 %v2495, %v2592
  %v2624 = vadd.f32 %v2496, %v2594
  %v2625 = vadd.f32 %v2497, %v2596
  %v2626 = vadd.f32 %v2498, %v2598
  %v2627 = vadd.f32 %v2499, %v2600
  %v2628 = vadd.f32 %v2500, %v2602
  %v2629 = vadd.f32 %v2501, %v2604
  %v2630 = vadd.f32 %v2502, %v2606
  %v2631 = vadd.f32 %v2503, %v2608
  %v2632 = vadd.f32 %v2504, %v2610
  %v2633 = vadd.f32 %v2505, %v2612
  %v2634 = vadd.f32 %v2506, %v2614
  %v2635 = vadd.f32 %v2507, %v2616
  %v2636 = vadd.f32 %v2508, %v2618
  %v2637 = vadd.f32 %v2509, %v2620
  %v2638 = vadd.f32 %v2510, %v2622
  %v2639 = vmul.f32 %v2623, %v795
  %v2640 = vmul.f32 %v2624, %v795
  %v2641 = vmul.f32 %v2625, %v795
  %v2642 = vmul.f32 %v2626, %v795
  %v2643 = vmul.f32 %v2627, %v795
  %v2644 = vmul.f32 %v2628, %v795
  %v2645 = vmul.f32 %v2629, %v795
  %v2646 = vmul.f32 %v2630, %v795
  %v2647 = vmul.f32 %v2631, %v795
  %v2648 = vmul.f32 %v2632, %v795
  %v2649 = vmul.f32 %v2633, %v795
  %v2650 = vmul.f32 %v2634, %v795
  %v2651 = vmul.f32 %v2635, %v795
  %v2652 = vmul.f32 %v2636, %v795
  %v2653 = vmul.f32 %v2637, %v795
  %v2654 = vmul.f32 %v2638, %v795
  %v2655 = vmul.f32 %v388, %v1311
  %v2656 = vmul.f32 %v389, %v1312
  %v2657 = vmul.f32 %v390, %v1313
  %v2658 = vmul.f32 %v391, %v1314
  %v2659 = vmul.f32 %v392, %v1315
  %v2660 = vmul.f32 %v393, %v1316
  %v2661 = vmul.f32 %v394, %v1317
  %v2662 = vmul.f32 %v395, %v1318
  %v2663 = vmul.f32 %v396, %v1319
  %v2664 = vmul.f32 %v397, %v1320
  %v2665 = vmul.f32 %v398, %v1321
  %v2666 = vmul.f32 %v399, %v1322
  %v2667 = vmul.f32 %v400, %v1323
  %v2668 = vmul.f32 %v401, %v1324
  %v2669 = vmul.f32 %v402, %v1325
  %v2670 = vmul.f32 %v403, %v1326
  %v2671 = vmul.f32 %v485, -0.25
  %v2672 = vmul.f32 %v486, -0.25
  %v2673 = vmul.f32 %v487, -0.25
  %v2674 = vmul.f32 %v488, -0.25
  %v2675 = vmul.f32 %v489, -0.25
  %v2676 = vmul.f32 %v490, -0.25
  %v2677 = vmul.f32 %v491, -0.25
  %v2678 = vmul.f32 %v492, -0.25
  %v2679 = vmul.f32 %v493, -0.25
  %v2680 = vmul.f32 %v494, -0.25
  %v2681 = vmul.f32 %v495, -0.25
  %v2682 = vmul.f32 %v496, -0.25
  %v2683 = vmul.f32 %v497, -0.25
  %v2684 = vmul.f32 %v498, -0.25
  %v2685 = vmul.f32 %v499, -0.25
  %v2686 = vmul.f32 %v500, -0.25
  %2688 = vset.pattern.permute.xlu0 7
  %2689 = vperm.xlu0 %2688, %v2671
  %v2690 = vpop.permute.xlu0 %2689
  %2693 = vset.pattern.permute.xlu0 7
  %2694 = vperm.xlu0 %2693, %v2672
  %v2695 = vpop.permute.xlu0 %2694
  %2698 = vset.pattern.permute.xlu0 7
  %2699 = vperm.xlu0 %2698, %v2673
  %v2700 = vpop.permute.xlu0 %2699
  %2703 = vset.pattern.permute.xlu0 7
  %2704 = vperm.xlu0 %2703, %v2674
  %v2705 = vpop.permute.xlu0 %2704
  %2708 = vset.pattern.permute.xlu0 7
  %2709 = vperm.xlu0 %2708, %v2675
  %v2710 = vpop.permute.xlu0 %2709
  %2713 = vset.pattern.permute.xlu0 7
  %2714 = vperm.xlu0 %2713, %v2676
  %v2715 = vpop.permute.xlu0 %2714
  %2718 = vset.pattern.permute.xlu0 7
  %2719 = vperm.xlu0 %2718, %v2677
  %v2720 = vpop.permute.xlu0 %2719
  %2723 = vset.pattern.permute.xlu0 7
  %2724 = vperm.xlu0 %2723, %v2678
  %v2725 = vpop.permute.xlu0 %2724
  %2728 = vset.pattern.permute.xlu0 7
  %2729 = vperm.xlu0 %2728, %v2679
  %v2730 = vpop.permute.xlu0 %2729
  %2733 = vset.pattern.permute.xlu0 7
  %2734 = vperm.xlu0 %2733, %v2680
  %v2735 = vpop.permute.xlu0 %2734
  %2738 = vset.pattern.permute.xlu0 7
  %2739 = vperm.xlu0 %2738, %v2681
  %v2740 = vpop.permute.xlu0 %2739
  %2743 = vset.pattern.permute.xlu0 7
  %2744 = vperm.xlu0 %2743, %v2682
  %v2745 = vpop.permute.xlu0 %2744
  %2748 = vset.pattern.permute.xlu0 7
  %2749 = vperm.xlu0 %2748, %v2683
  %v2750 = vpop.permute.xlu0 %2749
  %2753 = vset.pattern.permute.xlu0 7
  %2754 = vperm.xlu0 %2753, %v2684
  %v2755 = vpop.permute.xlu0 %2754
  %2758 = vset.pattern.permute.xlu0 7
  %2759 = vperm.xlu0 %2758, %v2685
  %v2760 = vpop.permute.xlu0 %2759
  %2763 = vset.pattern.permute.xlu0 7
  %2764 = vperm.xlu0 %2763, %v2686
  %v2765 = vpop.permute.xlu0 %2764
  %v2767 = vmul.f32 %v2655, %v2690
  %v2768 = vmul.f32 %v2656, %v2695
  %v2769 = vmul.f32 %v2657, %v2700
  %v2770 = vmul.f32 %v2658, %v2705
  %v2771 = vmul.f32 %v2659, %v2710
  %v2772 = vmul.f32 %v2660, %v2715
  %v2773 = vmul.f32 %v2661, %v2720
  %v2774 = vmul.f32 %v2662, %v2725
  %v2775 = vmul.f32 %v2663, %v2730
  %v2776 = vmul.f32 %v2664, %v2735
  %v2777 = vmul.f32 %v2665, %v2740
  %v2778 = vmul.f32 %v2666, %v2745
  %v2779 = vmul.f32 %v2667, %v2750
  %v2780 = vmul.f32 %v2668, %v2755
  %v2781 = vmul.f32 %v2669, %v2760
  %v2782 = vmul.f32 %v2670, %v2765
  %v2783 = vsel %vm877, %v2767, 0.0
  %v2784 = vsel %vm877, %v2768, 0.0
  %v2785 = vadd.f32 %v2783, %v2784
  %v2786 = vsel %vm877, %v2769, 0.0
  %v2787 = vadd.f32 %v2785, %v2786
  %v2788 = vsel %vm877, %v2770, 0.0
  %v2789 = vadd.f32 %v2787, %v2788
  %v2790 = vsel %vm877, %v2771, 0.0
  %v2791 = vadd.f32 %v2789, %v2790
  %v2792 = vsel %vm877, %v2772, 0.0
  %v2793 = vadd.f32 %v2791, %v2792
  %v2794 = vsel %vm877, %v2773, 0.0
  %v2795 = vadd.f32 %v2793, %v2794
  %v2796 = vsel %vm877, %v2774, 0.0
  %v2797 = vadd.f32 %v2795, %v2796
  %v2798 = vsel %vm877, %v2775, 0.0
  %v2799 = vadd.f32 %v2797, %v2798
  %v2800 = vsel %vm877, %v2776, 0.0
  %v2801 = vadd.f32 %v2799, %v2800
  %v2802 = vsel %vm877, %v2777, 0.0
  %v2803 = vadd.f32 %v2801, %v2802
  %v2804 = vsel %vm877, %v2778, 0.0
  %v2805 = vadd.f32 %v2803, %v2804
  %v2806 = vsel %vm877, %v2779, 0.0
  %v2807 = vadd.f32 %v2805, %v2806
  %v2808 = vsel %vm877, %v2780, 0.0
  %v2809 = vadd.f32 %v2807, %v2808
  %v2810 = vsel %vm877, %v2781, 0.0
  %v2811 = vadd.f32 %v2809, %v2810
  %v2812 = vsel %vm877, %v2782, 0.0
  %v2813 = vadd.f32 %v2811, %v2812
  %v2814 = vrot.slane %v2813, 4
  %v2815 = vadd.f32 %v2813, %v2814
  %v2816 = vrot.slane %v2815, 2
  %v2817 = vadd.f32 %v2815, %v2816
  %v2818 = vrot.slane %v2817, 1
  %v2819 = vadd.f32 %v2817, %v2818
  %vm2820 = vcmask 654848
  %v2821 = vsel %vm2820, %v2639, 0.0
  %v2822 = vsel %vm2820, %v2640, 0.0
  %v2823 = vadd.f32 %v2821, %v2822
  %v2824 = vsel %vm2820, %v2641, 0.0
  %v2825 = vadd.f32 %v2823, %v2824
  %v2826 = vsel %vm2820, %v2642, 0.0
  %v2827 = vadd.f32 %v2825, %v2826
  %v2828 = vsel %vm2820, %v2643, 0.0
  %v2829 = vadd.f32 %v2827, %v2828
  %v2830 = vsel %vm2820, %v2644, 0.0
  %v2831 = vadd.f32 %v2829, %v2830
  %v2832 = vsel %vm2820, %v2645, 0.0
  %v2833 = vadd.f32 %v2831, %v2832
  %v2834 = vsel %vm2820, %v2646, 0.0
  %v2835 = vadd.f32 %v2833, %v2834
  %v2836 = vsel %vm2820, %v2647, 0.0
  %v2837 = vadd.f32 %v2835, %v2836
  %v2838 = vsel %vm2820, %v2648, 0.0
  %v2839 = vadd.f32 %v2837, %v2838
  %v2840 = vsel %vm2820, %v2649, 0.0
  %v2841 = vadd.f32 %v2839, %v2840
  %v2842 = vsel %vm2820, %v2650, 0.0
  %v2843 = vadd.f32 %v2841, %v2842
  %v2844 = vsel %vm2820, %v2651, 0.0
  %v2845 = vadd.f32 %v2843, %v2844
  %v2846 = vsel %vm2820, %v2652, 0.0
  %v2847 = vadd.f32 %v2845, %v2846
  %v2848 = vsel %vm2820, %v2653, 0.0
  %v2849 = vadd.f32 %v2847, %v2848
  %v2850 = vsel %vm2820, %v2654, 0.0
  %v2851 = vadd.f32 %v2849, %v2850
  %v2852 = vrot.slane %v2851, 4
  %v2853 = vadd.f32 %v2851, %v2852
  %v2854 = vrot.slane %v2853, 2
  %v2855 = vadd.f32 %v2853, %v2854
  %v2856 = vrot.slane %v2855, 1
  %v2857 = vadd.f32 %v2855, %v2856
  %vm2858 = vcmask 7168
  %v2859 = vsel %vm2858, %v2383, 0.0
  %v2860 = vsel %vm2858, %v2384, 0.0
  %v2861 = vadd.f32 %v2859, %v2860
  %v2862 = vsel %vm2858, %v2385, 0.0
  %v2863 = vadd.f32 %v2861, %v2862
  %v2864 = vsel %vm2858, %v2386, 0.0
  %v2865 = vadd.f32 %v2863, %v2864
  %v2866 = vsel %vm2858, %v2387, 0.0
  %v2867 = vadd.f32 %v2865, %v2866
  %v2868 = vsel %vm2858, %v2388, 0.0
  %v2869 = vadd.f32 %v2867, %v2868
  %v2870 = vsel %vm2858, %v2389, 0.0
  %v2871 = vadd.f32 %v2869, %v2870
  %v2872 = vsel %vm2858, %v2390, 0.0
  %v2873 = vadd.f32 %v2871, %v2872
  %v2874 = vsel %vm2858, %v2391, 0.0
  %v2875 = vadd.f32 %v2873, %v2874
  %v2876 = vsel %vm2858, %v2392, 0.0
  %v2877 = vadd.f32 %v2875, %v2876
  %v2878 = vsel %vm2858, %v2393, 0.0
  %v2879 = vadd.f32 %v2877, %v2878
  %v2880 = vsel %vm2858, %v2394, 0.0
  %v2881 = vadd.f32 %v2879, %v2880
  %v2882 = vsel %vm2858, %v2395, 0.0
  %v2883 = vadd.f32 %v2881, %v2882
  %v2884 = vsel %vm2858, %v2396, 0.0
  %v2885 = vadd.f32 %v2883, %v2884
  %v2886 = vsel %vm2858, %v2397, 0.0
  %v2887 = vadd.f32 %v2885, %v2886
  %v2888 = vsel %vm2858, %v2398, 0.0
  %v2889 = vadd.f32 %v2887, %v2888
  %v2890 = vrot.slane %v2889, 4
  %v2891 = vadd.f32 %v2889, %v2890
  %v2892 = vrot.slane %v2891, 2
  %v2893 = vadd.f32 %v2891, %v2892
  %v2894 = vrot.slane %v2893, 1
  %v2895 = vadd.f32 %v2893, %v2894
  %vm2896 = vcmask 64568
  %v2897 = vsel %vm2896, %v404, 0.0
  %v2898 = vsel %vm2896, %v405, 0.0
  %v2899 = vadd.f32 %v2897, %v2898
  %v2900 = vsel %vm2896, %v406, 0.0
  %v2901 = vadd.f32 %v2899, %v2900
  %v2902 = vsel %vm2896, %v407, 0.0
  %v2903 = vadd.f32 %v2901, %v2902
  %v2904 = vsel %vm2896, %v408, 0.0
  %v2905 = vadd.f32 %v2903, %v2904
  %v2906 = vsel %vm2896, %v409, 0.0
  %v2907 = vadd.f32 %v2905, %v2906
  %v2908 = vsel %vm2896, %v410, 0.0
  %v2909 = vadd.f32 %v2907, %v2908
  %v2910 = vsel %vm2896, %v411, 0.0
  %v2911 = vadd.f32 %v2909, %v2910
  %v2912 = vsel %vm2896, %v412, 0.0
  %v2913 = vadd.f32 %v2911, %v2912
  %v2914 = vsel %vm2896, %v413, 0.0
  %v2915 = vadd.f32 %v2913, %v2914
  %v2916 = vsel %vm2896, %v414, 0.0
  %v2917 = vadd.f32 %v2915, %v2916
  %v2918 = vsel %vm2896, %v415, 0.0
  %v2919 = vadd.f32 %v2917, %v2918
  %v2920 = vsel %vm2896, %v416, 0.0
  %v2921 = vadd.f32 %v2919, %v2920
  %v2922 = vsel %vm2896, %v417, 0.0
  %v2923 = vadd.f32 %v2921, %v2922
  %v2924 = vsel %vm2896, %v418, 0.0
  %v2925 = vadd.f32 %v2923, %v2924
  %v2926 = vsel %vm2896, %v419, 0.0
  %v2927 = vadd.f32 %v2925, %v2926
  %v2928 = vrot.slane %v2927, 4
  %v2929 = vadd.f32 %v2927, %v2928
  %v2930 = vrot.slane %v2929, 2
  %v2931 = vadd.f32 %v2929, %v2930
  %v2932 = vrot.slane %v2931, 1
  %v2933 = vadd.f32 %v2931, %v2932
  %2935 = vrot.lane.b32.xlu0 %v2895, 80
  %v2936 = vpop.permute.xlu0 %2935
  %2939 = vrot.lane.b32.xlu0 %v2933, 74
  %v2940 = vpop.permute.xlu0 %2939
  %v2942 = vsel %vm877, %v2819, %v2857
  %vm2943 = vcmask 654336
  %v2944 = vsel %vm2943, %v2942, %v2936
  %vm2945 = vcmask 662528
  %v2946 = vsel %vm2945, %v2944, %v2940
  %vm2947 = vcmask 670720
  %v2948 = vsel %vm2947, %v2946, 0.0
  %v2949 = vld [vmem:[#allocation2] sm:$0x1]
  %v2950 = vadd.f32 %v2949, %v2948
  %2951 = vst [vmem:[#allocation2] sm:$0x1] %v2950
  // Predicated region
  $region46: #{yolo_loss_wrapper_forward.1} parent=0 // pred_check
    %p2952 = pneg %p36
  $region47: #{yolo_loss_wrapper_forward.1} parent=0 // pred_check_branch
    %2954 = sbr.rel (%p2952) target = $region49
  $region48: #{yolo_loss_wrapper_forward.1} parent=0 // pred_region
    %v2955 = vld [vmem:[#allocation2] sm:$0x1]
    %vm2956 = vcmask 516096
    %v2957 = vsel %vm2956, %v2955, 0.0
    %2958 = vadd.xlane.f32.xlu0 %v2957
    %v2959 = vpop.xlane.xlu0 %2958
    %v2961 = vperm.slane %v2955, 0
    %2962 = vrot.lane.b32.xlu0 %v2961, 64
    %v2963 = vpop.permute.xlu0 %2962
    %vm2965 = vcmask 122880
    %v2966 = vsel %vm2965, %v2963, 0.0
    %2967 = vadd.xlane.f32.xlu0 %v2966
    %v2968 = vpop.xlane.xlu0 %2967
    %v2969 = vmax.f32 %v2955, 1.0
    %v2970 = vrcp.pop %v2969
    %v2971 = vmul.f32 %v2969, %v2970
    %v2972 = vsub.f32 1.0, %v2971
    %v2973 = vmul.f32 %v2970, %v2972
    %v2974 = vadd.f32 %v2970, %v2973
    %vm2975 = vweird.f32 %v2969
    %vm2976 = vweird.f32 %v2970
    %vm2977 = vmor %vm2975, %vm2976
    %v2978 = vsel %vm2977, %v2970, %v2974
    %v2979 = vand.u32 2147483647, %v2969
    %vm2980 = vcmp.eq.f32.partialorder %v2979, 8.507059e+37
    %v2981 = vand.u32 %v2969, 2147483648
    %v2982 = vor.u32 1.1754944e-38, %v2981
    %v2983 = vsel %vm2980, %v2982, %v2978
    %v2984 = vmul.f32 1.0, %v2983
    %2986 = vrot.lane.b32.xlu0 %v2984, 127
    %v2987 = vpop.permute.xlu0 %2986
    %v2989 = vmul.f32 %v2955, %v2987
    %v2990 = vmul.f32 %v2989, 7.5
    %v2991 = vperm.slane %v2984, 0
    %2992 = vrot.lane.b32.xlu0 %v2991, 47
    %v2993 = vpop.permute.xlu0 %2992
    %v2995 = vmul.f32 %v2968, %v2993
    %v2996 = vmul.f32 %v2995, 0.5
    %v2997 = vmul.f32 %v2959, %v2993
    %v2998 = vmul.f32 %v2997, 1.5
    %3000 = vrot.lane.b32.xlu0 %v2996, 80
    %v3001 = vpop.permute.xlu0 %3000
    %v3003 = vadd.f32 %v2990, %v3001
    %3005 = vrot.lane.b32.xlu0 %v2998, 80
    %v3006 = vpop.permute.xlu0 %3005
    %v3008 = vadd.f32 %v3003, %v3006
    %v3009 = vmul.f32 %v3008, 2.0
    %v3011 = vperm.slane %v3009, 0
    %3012 = vrot.lane.b32.xlu0 %v3011, 48
    %v3013 = vpop.permute.xlu0 %3012
    %v3016 = vperm.slane %v2990, 0
    %3017 = vrot.lane.b32.xlu0 %v3016, 49
    %v3018 = vpop.permute.xlu0 %3017
    %3020 = vrot.lane.b32.xlu0 %v2996, 2
    %v3021 = vpop.permute.xlu0 %3020
    %3023 = vrot.lane.b32.xlu0 %v2998, 3
    %v3024 = vpop.permute.xlu0 %3023
    %v3026 = vsel %vm2858, %v3013, %v3018
    %vm3027 = vcmask 15360
    %v3028 = vsel %vm3027, %v3026, %v3021
    %vm3029 = vcmask 23552
    %v3030 = vsel %vm3029, %v3028, %v3024
    %vm3031 = vcmask 31744
    %v3032 = vsel %vm3031, %v3030, 0.0
    %3033 = vst [vmem:[%s10] sm:$0x1] %v3032
  $region49: #{yolo_loss_wrapper_forward.1} parent=0 // pred_fallthru
    _
  // Predicated region
  $region50: #{yolo_loss_wrapper_forward.1} parent=0 // pred_check
    _
  $region51: #{yolo_loss_wrapper_forward.1} parent=0 // pred_check_branch
    %3035 = sbr.rel (0) target = $region53
  $region52: #{yolo_loss_wrapper_forward.1} parent=0 // pred_region
    _
  $region53: #{yolo_loss_wrapper_forward.1} parent=0 // pred_fallthru
    _
  // Predicated region
  $region54: #{yolo_loss_wrapper_forward.1} parent=0 // pred_check
    _
  $region55: #{yolo_loss_wrapper_forward.1} parent=0 // pred_check_branch
    %3037 = sbr.rel (0) target = $region57
  $region56: #{yolo_loss_wrapper_forward.1} parent=0 // pred_region
    _
  $region57: #{yolo_loss_wrapper_forward.1} parent=0 // pred_fallthru
    _

</llo_original>
